<compile_context>
chip_gen: v7x
topology: tpu7x:2x2x1
jax: 0.10.0
libtpu: 0.0.40
codegen_flags: <defaults>
</compile_context>

<pallas_src>
import functools

import jax
import jax.numpy as jnp
from jax.experimental import pallas as pl
from jax.experimental.pallas import tpu as pltpu


def lstm_fc_kernel(x_ref, wih1_ref, whh1_ref, b1_ref,
                   w2_ref, b2_ref, wfc_ref, bfc_ref, out_ref,
                   *, seq_len, batch, hidden_dim):
    T, B, H = seq_len, batch, hidden_dim

    # ---- hoist all weight loads / bias broadcasts out of the recurrence ----
    wih1 = wih1_ref[...]                                   # (S, 4H)
    whh1 = whh1_ref[...]                                   # (H, 4H)
    w2 = w2_ref[...]                                       # (2H, 4H)
    wfc = wfc_ref[...]                                     # (H, OUT_PAD)
    b2 = jnp.broadcast_to(b2_ref[...], (B, 4 * H))         # broadcast once
    bfc = bfc_ref[...]                                     # (1, OUT_PAD)

    # ---- layer-1 input projection: loop-invariant, one big matmul ----------
    # x_ref is (T*B, S); bias folded in here so the loop only adds h @ whh1.
    xproj = (jnp.dot(x_ref[...], wih1, preferred_element_type=jnp.float32)
             + b1_ref[...])                                # (T*B, 4H)

    def activate(gates):
        # Full-vreg transcendentals (4H = 128 lanes rides the EUP), then
        # static lane slices to pick each gate.
        sig = jax.nn.sigmoid(gates)
        th = jnp.tanh(gates)
        i = sig[:, 0 * H:1 * H]
        f = sig[:, 1 * H:2 * H]
        g = th[:, 2 * H:3 * H]
        o = sig[:, 3 * H:4 * H]
        return i, f, g, o

    zeros = jnp.zeros((B, H), jnp.float32)
    h1, c1, h2, c2 = zeros, zeros, zeros, zeros

    # T is small & static: fully unrolled serial recurrence.
    # TODO(synk): for large batch, add a grid over B ("parallel" for v7x's 2 TCs)
    # and stream x over T with a BlockSpec/emit_pipeline to respect 64 MiB VMEM.
    for t in range(T):
        # ---- layer 1: x-path precomputed, only the recurrent matmul remains
        g1 = xproj[t * B:(t + 1) * B, :] + jnp.dot(
            h1, whh1, preferred_element_type=jnp.float32)
        i1, f1, gg1, o1 = activate(g1)
        c1 = f1 * c1 + i1 * gg1
        h1 = o1 * jnp.tanh(c1)

        # ---- layer 2: single fused matmul on concat([h1, h2_prev])
        hcat = jnp.concatenate([h1, h2], axis=-1)          # (B, 2H)
        g2 = jnp.dot(hcat, w2, preferred_element_type=jnp.float32) + b2
        i2, f2, gg2, o2 = activate(g2)
        c2 = f2 * c2 + i2 * gg2
        h2 = o2 * jnp.tanh(c2)

    # ---- fc on the last timestep's top-layer hidden state (lane-dense store)
    out_ref[...] = (jnp.dot(h2, wfc, preferred_element_type=jnp.float32) + bfc)


def make_params(sensors, y_dim, hidden_dim, dtype=jnp.float32):
    """All PyTorch params are nn.init.constant_(p, 0.01)."""
    H = hidden_dim
    c = 0.01
    # nn.LSTM adds b_ih + b_hh -> combined constant bias 0.02
    return {
        "wih1": jnp.full((sensors, 4 * H), c, dtype),
        "whh1": jnp.full((H, 4 * H), c, dtype),
        "b1":   jnp.full((1, 4 * H), 2 * c, dtype),
        "wih2": jnp.full((H, 4 * H), c, dtype),
        "whh2": jnp.full((H, 4 * H), c, dtype),
        "b2":   jnp.full((1, 4 * H), 2 * c, dtype),
        "wfc":  jnp.full((H, sensors * y_dim), c, dtype),
        "bfc":  jnp.full((1, sensors * y_dim), c, dtype),
    }


def make_random_params(key, sensors, y_dim, hidden_dim, scale=0.1):
    """Random weights so gate-order / transpose / fusion bugs are detectable."""
    H = hidden_dim
    ks = jax.random.split(key, 8)

    def rnd(k, shape):
        return scale * jax.random.normal(k, shape, jnp.float32)

    return {
        "wih1": rnd(ks[0], (sensors, 4 * H)),
        "whh1": rnd(ks[1], (H, 4 * H)),
        "b1":   rnd(ks[2], (1, 4 * H)),
        "wih2": rnd(ks[3], (H, 4 * H)),
        "whh2": rnd(ks[4], (H, 4 * H)),
        "b2":   rnd(ks[5], (1, 4 * H)),
        "wfc":  rnd(ks[6], (H, sensors * y_dim)),
        "bfc":  rnd(ks[7], (1, sensors * y_dim)),
    }


def lstm_model_forward(x, params, *, sensors, y_dim, hidden_dim):
    B, T, S = x.shape
    assert S == sensors
    H = hidden_dim
    out_dim = sensors * y_dim
    out_pad = max(128, ((out_dim + 127) // 128) * 128)   # lane-dense output width

    # time-major, flattened over (T, B): lets the kernel do the layer-1 input
    # projection as ONE (T*B, S) matmul.
    x_flat = jnp.transpose(x, (1, 0, 2)).astype(jnp.float32).reshape(T * B, S)

    # fuse layer-2 x/h matmuls: gates2 = concat([h1, h2_prev]) @ [wih2; whh2]
    w2 = jnp.concatenate([params["wih2"], params["whh2"]], axis=0)   # (2H, 4H)

    # pad FC columns so the final store is an unmasked full-lane vst
    wfc_pad = jnp.zeros((H, out_pad), jnp.float32).at[:, :out_dim].set(params["wfc"])
    bfc_pad = jnp.zeros((1, out_pad), jnp.float32).at[:, :out_dim].set(params["bfc"])

    out_padded = pl.pallas_call(
        functools.partial(lstm_fc_kernel, seq_len=T, batch=B, hidden_dim=H),
        out_shape=jax.ShapeDtypeStruct((B, out_pad), jnp.float32),
        in_specs=[pl.BlockSpec(memory_space=pltpu.MemorySpace.VMEM)] * 8,
        out_specs=pl.BlockSpec(memory_space=pltpu.MemorySpace.VMEM),
    )(x_flat,
      params["wih1"], params["whh1"], params["b1"],
      w2, params["b2"], wfc_pad, bfc_pad)

    # matches PyTorch: out.view(-1, y, sensors)
    return out_padded[:, :out_dim].reshape(B, y_dim, sensors)


def reference_forward(x, params, *, sensors, y_dim, hidden_dim):
    """Plain-JAX reference mirroring nn.LSTM + nn.Linear semantics (unfused)."""
    B, T, _ = x.shape
    H = hidden_dim

    def cell(x_t, h, c, wih, whh, b):
        g = x_t @ wih + h @ whh + b
        i = jax.nn.sigmoid(g[:, 0 * H:1 * H])
        f = jax.nn.sigmoid(g[:, 1 * H:2 * H])
        gg = jnp.tanh(g[:, 2 * H:3 * H])
        o = jax.nn.sigmoid(g[:, 3 * H:4 * H])
        c_new = f * c + i * gg
        return o * jnp.tanh(c_new), c_new

    h1 = c1 = h2 = c2 = jnp.zeros((B, H), jnp.float32)
    for t in range(T):
        x_t = x[:, t, :]
        h1, c1 = cell(x_t, h1, c1, params["wih1"], params["whh1"], params["b1"])
        h2, c2 = cell(h1, h2, c2, params["wih2"], params["whh2"], params["b2"])
    out = h2 @ params["wfc"] + params["bfc"]
    return out.reshape(B, y_dim, sensors)


if __name__ == "__main__":
    # small shapes implied by the module: x_input is (batch, seq, sensors)
    sensors, x_dim, y_dim = 4, 16, 3   # x_dim unused in forward (as in PyTorch)
    hidden_dim, num_layers = 32, 2
    B, T = 2, 8

    key = jax.random.PRNGKey(0)
    kx, kp = jax.random.split(key)
    x_input = jax.random.normal(kx, (B, T, sensors), dtype=jnp.float32)

    # 1) Module-spec init: every parameter is constant 0.01.
    params = make_params(sensors, y_dim, hidden_dim)
    out = lstm_model_forward(x_input, params,
                             sensors=sensors, y_dim=y_dim, hidden_dim=hidden_dim)
    out = jax.block_until_ready(out)
    ref = reference_forward(x_input, params,
                            sensors=sensors, y_dim=y_dim, hidden_dim=hidden_dim)
    assert out.shape == (B, y_dim, sensors)
    assert jnp.allclose(out, ref, atol=1e-4, rtol=1e-4), \
        "mismatch vs JAX reference (constant params)"

    # 2) Random weights: catches gate-order / transpose / weight-fusion bugs
    #    that the all-constant init cannot (per correctness review).
    params_rnd = make_random_params(kp, sensors, y_dim, hidden_dim)
    out_r = jax.block_until_ready(
        lstm_model_forward(x_input, params_rnd,
                           sensors=sensors, y_dim=y_dim, hidden_dim=hidden_dim))
    ref_r = reference_forward(x_input, params_rnd,
                              sensors=sensors, y_dim=y_dim, hidden_dim=hidden_dim)
    assert jnp.allclose(out_r, ref_r, atol=2e-2, rtol=2e-2), \
        "mismatch vs JAX reference (random params)"

    print("KERNEL_OK")
</pallas_src>

<mosaic_0001>
module attributes {stable_mosaic.version = 11 : i64} {
  func.func @lstm_fc_kernel(%arg0: memref<16x4xf32, #tpu.memory_space<vmem>>, %arg1: memref<4x128xf32, #tpu.memory_space<vmem>>, %arg2: memref<32x128xf32, #tpu.memory_space<vmem>>, %arg3: memref<1x128xf32, #tpu.memory_space<vmem>>, %arg4: memref<64x128xf32, #tpu.memory_space<vmem>>, %arg5: memref<1x128xf32, #tpu.memory_space<vmem>>, %arg6: memref<32x128xf32, #tpu.memory_space<vmem>>, %arg7: memref<1x128xf32, #tpu.memory_space<vmem>>, %arg8: memref<2x128xf32, #tpu.memory_space<vmem>>) attributes {dimension_semantics = [], scalar_prefetch = 0 : i64, scratch_operands = 0 : i64, tpu.core_type = #tpu.core_type<tc>} {
    %c0 = arith.constant 0 : index
    %c0_0 = arith.constant 0 : index
    %0 = vector.load %arg1[%c0, %c0_0] : memref<4x128xf32, #tpu.memory_space<vmem>>, vector<4x128xf32>
    %c0_1 = arith.constant 0 : index
    %c0_2 = arith.constant 0 : index
    %1 = vector.load %arg2[%c0_1, %c0_2] : memref<32x128xf32, #tpu.memory_space<vmem>>, vector<32x128xf32>
    %c0_3 = arith.constant 0 : index
    %c0_4 = arith.constant 0 : index
    %2 = vector.load %arg4[%c0_3, %c0_4] : memref<64x128xf32, #tpu.memory_space<vmem>>, vector<64x128xf32>
    %c0_5 = arith.constant 0 : index
    %c0_6 = arith.constant 0 : index
    %3 = vector.load %arg6[%c0_5, %c0_6] : memref<32x128xf32, #tpu.memory_space<vmem>>, vector<32x128xf32>
    %c0_7 = arith.constant 0 : index
    %c0_8 = arith.constant 0 : index
    %4 = vector.load %arg5[%c0_7, %c0_8] : memref<1x128xf32, #tpu.memory_space<vmem>>, vector<1x128xf32>
    %5 = vector.shape_cast %4 : vector<1x128xf32> to vector<1x128xf32>
    %6 = vector.broadcast %5 : vector<1x128xf32> to vector<2x128xf32>
    %c0_9 = arith.constant 0 : index
    %c0_10 = arith.constant 0 : index
    %7 = vector.load %arg7[%c0_9, %c0_10] : memref<1x128xf32, #tpu.memory_space<vmem>>, vector<1x128xf32>
    %c0_11 = arith.constant 0 : index
    %c0_12 = arith.constant 0 : index
    %8 = vector.load %arg0[%c0_11, %c0_12] : memref<16x4xf32, #tpu.memory_space<vmem>>, vector<16x4xf32>
    %cst = arith.constant dense<0.000000e+00> : vector<16x128xf32>
    %9 = tpu.matmul %8, %0, %cst {dimension_numbers = #tpu.dot_dimension_numbers<[1], [0], [0], [1], [0, 0, 1, 1], [], []>} : vector<16x4xf32>, vector<4x128xf32>, vector<16x128xf32> -> vector<16x128xf32>
    %c0_13 = arith.constant 0 : index
    %c0_14 = arith.constant 0 : index
    %10 = vector.load %arg3[%c0_13, %c0_14] : memref<1x128xf32, #tpu.memory_space<vmem>>, vector<1x128xf32>
    %11 = vector.broadcast %10 : vector<1x128xf32> to vector<16x128xf32>
    %12 = arith.addf %9, %11 : vector<16x128xf32>
    %cst_15 = arith.constant 0.000000e+00 : f32
    %13 = vector.broadcast %cst_15 : f32 to vector<2x32xf32>
    %14 = vector.extract_strided_slice %12 {offsets = [0, 0], sizes = [2, 128], strides = [1, 1]} : vector<16x128xf32> to vector<2x128xf32>
    %cst_16 = arith.constant dense<0.000000e+00> : vector<2x128xf32>
    %15 = tpu.matmul %13, %1, %cst_16 {dimension_numbers = #tpu.dot_dimension_numbers<[1], [0], [0], [1], [0, 0, 1, 1], [], []>} : vector<2x32xf32>, vector<32x128xf32>, vector<2x128xf32> -> vector<2x128xf32>
    %16 = arith.addf %14, %15 : vector<2x128xf32>
    %17 = arith.negf %16 : vector<2x128xf32>
    %18 = math.exp %17 : vector<2x128xf32>
    %cst_17 = arith.constant 1.000000e+00 : f32
    %19 = vector.broadcast %cst_17 : f32 to vector<2x128xf32>
    %20 = arith.addf %19, %18 : vector<2x128xf32>
    %21 = arith.divf %19, %20 : vector<2x128xf32>
    %22 = math.tanh %16 : vector<2x128xf32>
    %23 = vector.extract_strided_slice %21 {offsets = [0, 0], sizes = [2, 32], strides = [1, 1]} : vector<2x128xf32> to vector<2x32xf32>
    %24 = vector.extract_strided_slice %21 {offsets = [0, 32], sizes = [2, 32], strides = [1, 1]} : vector<2x128xf32> to vector<2x32xf32>
    %25 = vector.extract_strided_slice %22 {offsets = [0, 64], sizes = [2, 32], strides = [1, 1]} : vector<2x128xf32> to vector<2x32xf32>
    %26 = vector.extract_strided_slice %21 {offsets = [0, 96], sizes = [2, 32], strides = [1, 1]} : vector<2x128xf32> to vector<2x32xf32>
    %27 = arith.mulf %24, %13 : vector<2x32xf32>
    %28 = arith.mulf %23, %25 : vector<2x32xf32>
    %29 = arith.addf %27, %28 : vector<2x32xf32>
    %30 = math.tanh %29 : vector<2x32xf32>
    %31 = arith.mulf %26, %30 : vector<2x32xf32>
    %32 = tpu.concatenate %31, %13 in 1 : vector<2x32xf32>, vector<2x32xf32> -> vector<2x64xf32>
    %cst_18 = arith.constant dense<0.000000e+00> : vector<2x128xf32>
    %33 = tpu.matmul %32, %2, %cst_18 {dimension_numbers = #tpu.dot_dimension_numbers<[1], [0], [0], [1], [0, 0, 1, 1], [], []>} : vector<2x64xf32>, vector<64x128xf32>, vector<2x128xf32> -> vector<2x128xf32>
    %34 = arith.addf %33, %6 : vector<2x128xf32>
    %35 = arith.negf %34 : vector<2x128xf32>
    %36 = math.exp %35 : vector<2x128xf32>
    %cst_19 = arith.constant 1.000000e+00 : f32
    %37 = vector.broadcast %cst_19 : f32 to vector<2x128xf32>
    %38 = arith.addf %37, %36 : vector<2x128xf32>
    %39 = arith.divf %37, %38 : vector<2x128xf32>
    %40 = math.tanh %34 : vector<2x128xf32>
    %41 = vector.extract_strided_slice %39 {offsets = [0, 0], sizes = [2, 32], strides = [1, 1]} : vector<2x128xf32> to vector<2x32xf32>
    %42 = vector.extract_strided_slice %39 {offsets = [0, 32], sizes = [2, 32], strides = [1, 1]} : vector<2x128xf32> to vector<2x32xf32>
    %43 = vector.extract_strided_slice %40 {offsets = [0, 64], sizes = [2, 32], strides = [1, 1]} : vector<2x128xf32> to vector<2x32xf32>
    %44 = vector.extract_strided_slice %39 {offsets = [0, 96], sizes = [2, 32], strides = [1, 1]} : vector<2x128xf32> to vector<2x32xf32>
    %45 = arith.mulf %42, %13 : vector<2x32xf32>
    %46 = arith.mulf %41, %43 : vector<2x32xf32>
    %47 = arith.addf %45, %46 : vector<2x32xf32>
    %48 = math.tanh %47 : vector<2x32xf32>
    %49 = arith.mulf %44, %48 : vector<2x32xf32>
    %50 = vector.extract_strided_slice %12 {offsets = [2, 0], sizes = [2, 128], strides = [1, 1]} : vector<16x128xf32> to vector<2x128xf32>
    %cst_20 = arith.constant dense<0.000000e+00> : vector<2x128xf32>
    %51 = tpu.matmul %31, %1, %cst_20 {dimension_numbers = #tpu.dot_dimension_numbers<[1], [0], [0], [1], [0, 0, 1, 1], [], []>} : vector<2x32xf32>, vector<32x128xf32>, vector<2x128xf32> -> vector<2x128xf32>
    %52 = arith.addf %50, %51 : vector<2x128xf32>
    %53 = arith.negf %52 : vector<2x128xf32>
    %54 = math.exp %53 : vector<2x128xf32>
    %cst_21 = arith.constant 1.000000e+00 : f32
    %55 = vector.broadcast %cst_21 : f32 to vector<2x128xf32>
    %56 = arith.addf %55, %54 : vector<2x128xf32>
    %57 = arith.divf %55, %56 : vector<2x128xf32>
    %58 = math.tanh %52 : vector<2x128xf32>
    %59 = vector.extract_strided_slice %57 {offsets = [0, 0], sizes = [2, 32], strides = [1, 1]} : vector<2x128xf32> to vector<2x32xf32>
    %60 = vector.extract_strided_slice %57 {offsets = [0, 32], sizes = [2, 32], strides = [1, 1]} : vector<2x128xf32> to vector<2x32xf32>
    %61 = vector.extract_strided_slice %58 {offsets = [0, 64], sizes = [2, 32], strides = [1, 1]} : vector<2x128xf32> to vector<2x32xf32>
    %62 = vector.extract_strided_slice %57 {offsets = [0, 96], sizes = [2, 32], strides = [1, 1]} : vector<2x128xf32> to vector<2x32xf32>
    %63 = arith.mulf %60, %29 : vector<2x32xf32>
    %64 = arith.mulf %59, %61 : vector<2x32xf32>
    %65 = arith.addf %63, %64 : vector<2x32xf32>
    %66 = math.tanh %65 : vector<2x32xf32>
    %67 = arith.mulf %62, %66 : vector<2x32xf32>
    %68 = tpu.concatenate %67, %49 in 1 : vector<2x32xf32>, vector<2x32xf32> -> vector<2x64xf32>
    %cst_22 = arith.constant dense<0.000000e+00> : vector<2x128xf32>
    %69 = tpu.matmul %68, %2, %cst_22 {dimension_numbers = #tpu.dot_dimension_numbers<[1], [0], [0], [1], [0, 0, 1, 1], [], []>} : vector<2x64xf32>, vector<64x128xf32>, vector<2x128xf32> -> vector<2x128xf32>
    %70 = arith.addf %69, %6 : vector<2x128xf32>
    %71 = arith.negf %70 : vector<2x128xf32>
    %72 = math.exp %71 : vector<2x128xf32>
    %cst_23 = arith.constant 1.000000e+00 : f32
    %73 = vector.broadcast %cst_23 : f32 to vector<2x128xf32>
    %74 = arith.addf %73, %72 : vector<2x128xf32>
    %75 = arith.divf %73, %74 : vector<2x128xf32>
    %76 = math.tanh %70 : vector<2x128xf32>
    %77 = vector.extract_strided_slice %75 {offsets = [0, 0], sizes = [2, 32], strides = [1, 1]} : vector<2x128xf32> to vector<2x32xf32>
    %78 = vector.extract_strided_slice %75 {offsets = [0, 32], sizes = [2, 32], strides = [1, 1]} : vector<2x128xf32> to vector<2x32xf32>
    %79 = vector.extract_strided_slice %76 {offsets = [0, 64], sizes = [2, 32], strides = [1, 1]} : vector<2x128xf32> to vector<2x32xf32>
    %80 = vector.extract_strided_slice %75 {offsets = [0, 96], sizes = [2, 32], strides = [1, 1]} : vector<2x128xf32> to vector<2x32xf32>
    %81 = arith.mulf %78, %47 : vector<2x32xf32>
    %82 = arith.mulf %77, %79 : vector<2x32xf32>
    %83 = arith.addf %81, %82 : vector<2x32xf32>
    %84 = math.tanh %83 : vector<2x32xf32>
    %85 = arith.mulf %80, %84 : vector<2x32xf32>
    %86 = vector.extract_strided_slice %12 {offsets = [4, 0], sizes = [2, 128], strides = [1, 1]} : vector<16x128xf32> to vector<2x128xf32>
    %cst_24 = arith.constant dense<0.000000e+00> : vector<2x128xf32>
    %87 = tpu.matmul %67, %1, %cst_24 {dimension_numbers = #tpu.dot_dimension_numbers<[1], [0], [0], [1], [0, 0, 1, 1], [], []>} : vector<2x32xf32>, vector<32x128xf32>, vector<2x128xf32> -> vector<2x128xf32>
    %88 = arith.addf %86, %87 : vector<2x128xf32>
    %89 = arith.negf %88 : vector<2x128xf32>
    %90 = math.exp %89 : vector<2x128xf32>
    %cst_25 = arith.constant 1.000000e+00 : f32
    %91 = vector.broadcast %cst_25 : f32 to vector<2x128xf32>
    %92 = arith.addf %91, %90 : vector<2x128xf32>
    %93 = arith.divf %91, %92 : vector<2x128xf32>
    %94 = math.tanh %88 : vector<2x128xf32>
    %95 = vector.extract_strided_slice %93 {offsets = [0, 0], sizes = [2, 32], strides = [1, 1]} : vector<2x128xf32> to vector<2x32xf32>
    %96 = vector.extract_strided_slice %93 {offsets = [0, 32], sizes = [2, 32], strides = [1, 1]} : vector<2x128xf32> to vector<2x32xf32>
    %97 = vector.extract_strided_slice %94 {offsets = [0, 64], sizes = [2, 32], strides = [1, 1]} : vector<2x128xf32> to vector<2x32xf32>
    %98 = vector.extract_strided_slice %93 {offsets = [0, 96], sizes = [2, 32], strides = [1, 1]} : vector<2x128xf32> to vector<2x32xf32>
    %99 = arith.mulf %96, %65 : vector<2x32xf32>
    %100 = arith.mulf %95, %97 : vector<2x32xf32>
    %101 = arith.addf %99, %100 : vector<2x32xf32>
    %102 = math.tanh %101 : vector<2x32xf32>
    %103 = arith.mulf %98, %102 : vector<2x32xf32>
    %104 = tpu.concatenate %103, %85 in 1 : vector<2x32xf32>, vector<2x32xf32> -> vector<2x64xf32>
    %cst_26 = arith.constant dense<0.000000e+00> : vector<2x128xf32>
    %105 = tpu.matmul %104, %2, %cst_26 {dimension_numbers = #tpu.dot_dimension_numbers<[1], [0], [0], [1], [0, 0, 1, 1], [], []>} : vector<2x64xf32>, vector<64x128xf32>, vector<2x128xf32> -> vector<2x128xf32>
    %106 = arith.addf %105, %6 : vector<2x128xf32>
    %107 = arith.negf %106 : vector<2x128xf32>
    %108 = math.exp %107 : vector<2x128xf32>
    %cst_27 = arith.constant 1.000000e+00 : f32
    %109 = vector.broadcast %cst_27 : f32 to vector<2x128xf32>
    %110 = arith.addf %109, %108 : vector<2x128xf32>
    %111 = arith.divf %109, %110 : vector<2x128xf32>
    %112 = math.tanh %106 : vector<2x128xf32>
    %113 = vector.extract_strided_slice %111 {offsets = [0, 0], sizes = [2, 32], strides = [1, 1]} : vector<2x128xf32> to vector<2x32xf32>
    %114 = vector.extract_strided_slice %111 {offsets = [0, 32], sizes = [2, 32], strides = [1, 1]} : vector<2x128xf32> to vector<2x32xf32>
    %115 = vector.extract_strided_slice %112 {offsets = [0, 64], sizes = [2, 32], strides = [1, 1]} : vector<2x128xf32> to vector<2x32xf32>
    %116 = vector.extract_strided_slice %111 {offsets = [0, 96], sizes = [2, 32], strides = [1, 1]} : vector<2x128xf32> to vector<2x32xf32>
    %117 = arith.mulf %114, %83 : vector<2x32xf32>
    %118 = arith.mulf %113, %115 : vector<2x32xf32>
    %119 = arith.addf %117, %118 : vector<2x32xf32>
    %120 = math.tanh %119 : vector<2x32xf32>
    %121 = arith.mulf %116, %120 : vector<2x32xf32>
    %122 = vector.extract_strided_slice %12 {offsets = [6, 0], sizes = [2, 128], strides = [1, 1]} : vector<16x128xf32> to vector<2x128xf32>
    %cst_28 = arith.constant dense<0.000000e+00> : vector<2x128xf32>
    %123 = tpu.matmul %103, %1, %cst_28 {dimension_numbers = #tpu.dot_dimension_numbers<[1], [0], [0], [1], [0, 0, 1, 1], [], []>} : vector<2x32xf32>, vector<32x128xf32>, vector<2x128xf32> -> vector<2x128xf32>
    %124 = arith.addf %122, %123 : vector<2x128xf32>
    %125 = arith.negf %124 : vector<2x128xf32>
    %126 = math.exp %125 : vector<2x128xf32>
    %cst_29 = arith.constant 1.000000e+00 : f32
    %127 = vector.broadcast %cst_29 : f32 to vector<2x128xf32>
    %128 = arith.addf %127, %126 : vector<2x128xf32>
    %129 = arith.divf %127, %128 : vector<2x128xf32>
    %130 = math.tanh %124 : vector<2x128xf32>
    %131 = vector.extract_strided_slice %129 {offsets = [0, 0], sizes = [2, 32], strides = [1, 1]} : vector<2x128xf32> to vector<2x32xf32>
    %132 = vector.extract_strided_slice %129 {offsets = [0, 32], sizes = [2, 32], strides = [1, 1]} : vector<2x128xf32> to vector<2x32xf32>
    %133 = vector.extract_strided_slice %130 {offsets = [0, 64], sizes = [2, 32], strides = [1, 1]} : vector<2x128xf32> to vector<2x32xf32>
    %134 = vector.extract_strided_slice %129 {offsets = [0, 96], sizes = [2, 32], strides = [1, 1]} : vector<2x128xf32> to vector<2x32xf32>
    %135 = arith.mulf %132, %101 : vector<2x32xf32>
    %136 = arith.mulf %131, %133 : vector<2x32xf32>
    %137 = arith.addf %135, %136 : vector<2x32xf32>
    %138 = math.tanh %137 : vector<2x32xf32>
    %139 = arith.mulf %134, %138 : vector<2x32xf32>
    %140 = tpu.concatenate %139, %121 in 1 : vector<2x32xf32>, vector<2x32xf32> -> vector<2x64xf32>
    %cst_30 = arith.constant dense<0.000000e+00> : vector<2x128xf32>
    %141 = tpu.matmul %140, %2, %cst_30 {dimension_numbers = #tpu.dot_dimension_numbers<[1], [0], [0], [1], [0, 0, 1, 1], [], []>} : vector<2x64xf32>, vector<64x128xf32>, vector<2x128xf32> -> vector<2x128xf32>
    %142 = arith.addf %141, %6 : vector<2x128xf32>
    %143 = arith.negf %142 : vector<2x128xf32>
    %144 = math.exp %143 : vector<2x128xf32>
    %cst_31 = arith.constant 1.000000e+00 : f32
    %145 = vector.broadcast %cst_31 : f32 to vector<2x128xf32>
    %146 = arith.addf %145, %144 : vector<2x128xf32>
    %147 = arith.divf %145, %146 : vector<2x128xf32>
    %148 = math.tanh %142 : vector<2x128xf32>
    %149 = vector.extract_strided_slice %147 {offsets = [0, 0], sizes = [2, 32], strides = [1, 1]} : vector<2x128xf32> to vector<2x32xf32>
    %150 = vector.extract_strided_slice %147 {offsets = [0, 32], sizes = [2, 32], strides = [1, 1]} : vector<2x128xf32> to vector<2x32xf32>
    %151 = vector.extract_strided_slice %148 {offsets = [0, 64], sizes = [2, 32], strides = [1, 1]} : vector<2x128xf32> to vector<2x32xf32>
    %152 = vector.extract_strided_slice %147 {offsets = [0, 96], sizes = [2, 32], strides = [1, 1]} : vector<2x128xf32> to vector<2x32xf32>
    %153 = arith.mulf %150, %119 : vector<2x32xf32>
    %154 = arith.mulf %149, %151 : vector<2x32xf32>
    %155 = arith.addf %153, %154 : vector<2x32xf32>
    %156 = math.tanh %155 : vector<2x32xf32>
    %157 = arith.mulf %152, %156 : vector<2x32xf32>
    %158 = vector.extract_strided_slice %12 {offsets = [8, 0], sizes = [2, 128], strides = [1, 1]} : vector<16x128xf32> to vector<2x128xf32>
    %cst_32 = arith.constant dense<0.000000e+00> : vector<2x128xf32>
    %159 = tpu.matmul %139, %1, %cst_32 {dimension_numbers = #tpu.dot_dimension_numbers<[1], [0], [0], [1], [0, 0, 1, 1], [], []>} : vector<2x32xf32>, vector<32x128xf32>, vector<2x128xf32> -> vector<2x128xf32>
    %160 = arith.addf %158, %159 : vector<2x128xf32>
    %161 = arith.negf %160 : vector<2x128xf32>
    %162 = math.exp %161 : vector<2x128xf32>
    %cst_33 = arith.constant 1.000000e+00 : f32
    %163 = vector.broadcast %cst_33 : f32 to vector<2x128xf32>
    %164 = arith.addf %163, %162 : vector<2x128xf32>
    %165 = arith.divf %163, %164 : vector<2x128xf32>
    %166 = math.tanh %160 : vector<2x128xf32>
    %167 = vector.extract_strided_slice %165 {offsets = [0, 0], sizes = [2, 32], strides = [1, 1]} : vector<2x128xf32> to vector<2x32xf32>
    %168 = vector.extract_strided_slice %165 {offsets = [0, 32], sizes = [2, 32], strides = [1, 1]} : vector<2x128xf32> to vector<2x32xf32>
    %169 = vector.extract_strided_slice %166 {offsets = [0, 64], sizes = [2, 32], strides = [1, 1]} : vector<2x128xf32> to vector<2x32xf32>
    %170 = vector.extract_strided_slice %165 {offsets = [0, 96], sizes = [2, 32], strides = [1, 1]} : vector<2x128xf32> to vector<2x32xf32>
    %171 = arith.mulf %168, %137 : vector<2x32xf32>
    %172 = arith.mulf %167, %169 : vector<2x32xf32>
    %173 = arith.addf %171, %172 : vector<2x32xf32>
    %174 = math.tanh %173 : vector<2x32xf32>
    %175 = arith.mulf %170, %174 : vector<2x32xf32>
    %176 = tpu.concatenate %175, %157 in 1 : vector<2x32xf32>, vector<2x32xf32> -> vector<2x64xf32>
    %cst_34 = arith.constant dense<0.000000e+00> : vector<2x128xf32>
    %177 = tpu.matmul %176, %2, %cst_34 {dimension_numbers = #tpu.dot_dimension_numbers<[1], [0], [0], [1], [0, 0, 1, 1], [], []>} : vector<2x64xf32>, vector<64x128xf32>, vector<2x128xf32> -> vector<2x128xf32>
    %178 = arith.addf %177, %6 : vector<2x128xf32>
    %179 = arith.negf %178 : vector<2x128xf32>
    %180 = math.exp %179 : vector<2x128xf32>
    %cst_35 = arith.constant 1.000000e+00 : f32
    %181 = vector.broadcast %cst_35 : f32 to vector<2x128xf32>
    %182 = arith.addf %181, %180 : vector<2x128xf32>
    %183 = arith.divf %181, %182 : vector<2x128xf32>
    %184 = math.tanh %178 : vector<2x128xf32>
    %185 = vector.extract_strided_slice %183 {offsets = [0, 0], sizes = [2, 32], strides = [1, 1]} : vector<2x128xf32> to vector<2x32xf32>
    %186 = vector.extract_strided_slice %183 {offsets = [0, 32], sizes = [2, 32], strides = [1, 1]} : vector<2x128xf32> to vector<2x32xf32>
    %187 = vector.extract_strided_slice %184 {offsets = [0, 64], sizes = [2, 32], strides = [1, 1]} : vector<2x128xf32> to vector<2x32xf32>
    %188 = vector.extract_strided_slice %183 {offsets = [0, 96], sizes = [2, 32], strides = [1, 1]} : vector<2x128xf32> to vector<2x32xf32>
    %189 = arith.mulf %186, %155 : vector<2x32xf32>
    %190 = arith.mulf %185, %187 : vector<2x32xf32>
    %191 = arith.addf %189, %190 : vector<2x32xf32>
    %192 = math.tanh %191 : vector<2x32xf32>
    %193 = arith.mulf %188, %192 : vector<2x32xf32>
    %194 = vector.extract_strided_slice %12 {offsets = [10, 0], sizes = [2, 128], strides = [1, 1]} : vector<16x128xf32> to vector<2x128xf32>
    %cst_36 = arith.constant dense<0.000000e+00> : vector<2x128xf32>
    %195 = tpu.matmul %175, %1, %cst_36 {dimension_numbers = #tpu.dot_dimension_numbers<[1], [0], [0], [1], [0, 0, 1, 1], [], []>} : vector<2x32xf32>, vector<32x128xf32>, vector<2x128xf32> -> vector<2x128xf32>
    %196 = arith.addf %194, %195 : vector<2x128xf32>
    %197 = arith.negf %196 : vector<2x128xf32>
    %198 = math.exp %197 : vector<2x128xf32>
    %cst_37 = arith.constant 1.000000e+00 : f32
    %199 = vector.broadcast %cst_37 : f32 to vector<2x128xf32>
    %200 = arith.addf %199, %198 : vector<2x128xf32>
    %201 = arith.divf %199, %200 : vector<2x128xf32>
    %202 = math.tanh %196 : vector<2x128xf32>
    %203 = vector.extract_strided_slice %201 {offsets = [0, 0], sizes = [2, 32], strides = [1, 1]} : vector<2x128xf32> to vector<2x32xf32>
    %204 = vector.extract_strided_slice %201 {offsets = [0, 32], sizes = [2, 32], strides = [1, 1]} : vector<2x128xf32> to vector<2x32xf32>
    %205 = vector.extract_strided_slice %202 {offsets = [0, 64], sizes = [2, 32], strides = [1, 1]} : vector<2x128xf32> to vector<2x32xf32>
    %206 = vector.extract_strided_slice %201 {offsets = [0, 96], sizes = [2, 32], strides = [1, 1]} : vector<2x128xf32> to vector<2x32xf32>
    %207 = arith.mulf %204, %173 : vector<2x32xf32>
    %208 = arith.mulf %203, %205 : vector<2x32xf32>
    %209 = arith.addf %207, %208 : vector<2x32xf32>
    %210 = math.tanh %209 : vector<2x32xf32>
    %211 = arith.mulf %206, %210 : vector<2x32xf32>
    %212 = tpu.concatenate %211, %193 in 1 : vector<2x32xf32>, vector<2x32xf32> -> vector<2x64xf32>
    %cst_38 = arith.constant dense<0.000000e+00> : vector<2x128xf32>
    %213 = tpu.matmul %212, %2, %cst_38 {dimension_numbers = #tpu.dot_dimension_numbers<[1], [0], [0], [1], [0, 0, 1, 1], [], []>} : vector<2x64xf32>, vector<64x128xf32>, vector<2x128xf32> -> vector<2x128xf32>
    %214 = arith.addf %213, %6 : vector<2x128xf32>
    %215 = arith.negf %214 : vector<2x128xf32>
    %216 = math.exp %215 : vector<2x128xf32>
    %cst_39 = arith.constant 1.000000e+00 : f32
    %217 = vector.broadcast %cst_39 : f32 to vector<2x128xf32>
    %218 = arith.addf %217, %216 : vector<2x128xf32>
    %219 = arith.divf %217, %218 : vector<2x128xf32>
    %220 = math.tanh %214 : vector<2x128xf32>
    %221 = vector.extract_strided_slice %219 {offsets = [0, 0], sizes = [2, 32], strides = [1, 1]} : vector<2x128xf32> to vector<2x32xf32>
    %222 = vector.extract_strided_slice %219 {offsets = [0, 32], sizes = [2, 32], strides = [1, 1]} : vector<2x128xf32> to vector<2x32xf32>
    %223 = vector.extract_strided_slice %220 {offsets = [0, 64], sizes = [2, 32], strides = [1, 1]} : vector<2x128xf32> to vector<2x32xf32>
    %224 = vector.extract_strided_slice %219 {offsets = [0, 96], sizes = [2, 32], strides = [1, 1]} : vector<2x128xf32> to vector<2x32xf32>
    %225 = arith.mulf %222, %191 : vector<2x32xf32>
    %226 = arith.mulf %221, %223 : vector<2x32xf32>
    %227 = arith.addf %225, %226 : vector<2x32xf32>
    %228 = math.tanh %227 : vector<2x32xf32>
    %229 = arith.mulf %224, %228 : vector<2x32xf32>
    %230 = vector.extract_strided_slice %12 {offsets = [12, 0], sizes = [2, 128], strides = [1, 1]} : vector<16x128xf32> to vector<2x128xf32>
    %cst_40 = arith.constant dense<0.000000e+00> : vector<2x128xf32>
    %231 = tpu.matmul %211, %1, %cst_40 {dimension_numbers = #tpu.dot_dimension_numbers<[1], [0], [0], [1], [0, 0, 1, 1], [], []>} : vector<2x32xf32>, vector<32x128xf32>, vector<2x128xf32> -> vector<2x128xf32>
    %232 = arith.addf %230, %231 : vector<2x128xf32>
    %233 = arith.negf %232 : vector<2x128xf32>
    %234 = math.exp %233 : vector<2x128xf32>
    %cst_41 = arith.constant 1.000000e+00 : f32
    %235 = vector.broadcast %cst_41 : f32 to vector<2x128xf32>
    %236 = arith.addf %235, %234 : vector<2x128xf32>
    %237 = arith.divf %235, %236 : vector<2x128xf32>
    %238 = math.tanh %232 : vector<2x128xf32>
    %239 = vector.extract_strided_slice %237 {offsets = [0, 0], sizes = [2, 32], strides = [1, 1]} : vector<2x128xf32> to vector<2x32xf32>
    %240 = vector.extract_strided_slice %237 {offsets = [0, 32], sizes = [2, 32], strides = [1, 1]} : vector<2x128xf32> to vector<2x32xf32>
    %241 = vector.extract_strided_slice %238 {offsets = [0, 64], sizes = [2, 32], strides = [1, 1]} : vector<2x128xf32> to vector<2x32xf32>
    %242 = vector.extract_strided_slice %237 {offsets = [0, 96], sizes = [2, 32], strides = [1, 1]} : vector<2x128xf32> to vector<2x32xf32>
    %243 = arith.mulf %240, %209 : vector<2x32xf32>
    %244 = arith.mulf %239, %241 : vector<2x32xf32>
    %245 = arith.addf %243, %244 : vector<2x32xf32>
    %246 = math.tanh %245 : vector<2x32xf32>
    %247 = arith.mulf %242, %246 : vector<2x32xf32>
    %248 = tpu.concatenate %247, %229 in 1 : vector<2x32xf32>, vector<2x32xf32> -> vector<2x64xf32>
    %cst_42 = arith.constant dense<0.000000e+00> : vector<2x128xf32>
    %249 = tpu.matmul %248, %2, %cst_42 {dimension_numbers = #tpu.dot_dimension_numbers<[1], [0], [0], [1], [0, 0, 1, 1], [], []>} : vector<2x64xf32>, vector<64x128xf32>, vector<2x128xf32> -> vector<2x128xf32>
    %250 = arith.addf %249, %6 : vector<2x128xf32>
    %251 = arith.negf %250 : vector<2x128xf32>
    %252 = math.exp %251 : vector<2x128xf32>
    %cst_43 = arith.constant 1.000000e+00 : f32
    %253 = vector.broadcast %cst_43 : f32 to vector<2x128xf32>
    %254 = arith.addf %253, %252 : vector<2x128xf32>
    %255 = arith.divf %253, %254 : vector<2x128xf32>
    %256 = math.tanh %250 : vector<2x128xf32>
    %257 = vector.extract_strided_slice %255 {offsets = [0, 0], sizes = [2, 32], strides = [1, 1]} : vector<2x128xf32> to vector<2x32xf32>
    %258 = vector.extract_strided_slice %255 {offsets = [0, 32], sizes = [2, 32], strides = [1, 1]} : vector<2x128xf32> to vector<2x32xf32>
    %259 = vector.extract_strided_slice %256 {offsets = [0, 64], sizes = [2, 32], strides = [1, 1]} : vector<2x128xf32> to vector<2x32xf32>
    %260 = vector.extract_strided_slice %255 {offsets = [0, 96], sizes = [2, 32], strides = [1, 1]} : vector<2x128xf32> to vector<2x32xf32>
    %261 = arith.mulf %258, %227 : vector<2x32xf32>
    %262 = arith.mulf %257, %259 : vector<2x32xf32>
    %263 = arith.addf %261, %262 : vector<2x32xf32>
    %264 = math.tanh %263 : vector<2x32xf32>
    %265 = arith.mulf %260, %264 : vector<2x32xf32>
    %266 = vector.extract_strided_slice %12 {offsets = [14, 0], sizes = [2, 128], strides = [1, 1]} : vector<16x128xf32> to vector<2x128xf32>
    %cst_44 = arith.constant dense<0.000000e+00> : vector<2x128xf32>
    %267 = tpu.matmul %247, %1, %cst_44 {dimension_numbers = #tpu.dot_dimension_numbers<[1], [0], [0], [1], [0, 0, 1, 1], [], []>} : vector<2x32xf32>, vector<32x128xf32>, vector<2x128xf32> -> vector<2x128xf32>
    %268 = arith.addf %266, %267 : vector<2x128xf32>
    %269 = arith.negf %268 : vector<2x128xf32>
    %270 = math.exp %269 : vector<2x128xf32>
    %cst_45 = arith.constant 1.000000e+00 : f32
    %271 = vector.broadcast %cst_45 : f32 to vector<2x128xf32>
    %272 = arith.addf %271, %270 : vector<2x128xf32>
    %273 = arith.divf %271, %272 : vector<2x128xf32>
    %274 = math.tanh %268 : vector<2x128xf32>
    %275 = vector.extract_strided_slice %273 {offsets = [0, 0], sizes = [2, 32], strides = [1, 1]} : vector<2x128xf32> to vector<2x32xf32>
    %276 = vector.extract_strided_slice %273 {offsets = [0, 32], sizes = [2, 32], strides = [1, 1]} : vector<2x128xf32> to vector<2x32xf32>
    %277 = vector.extract_strided_slice %274 {offsets = [0, 64], sizes = [2, 32], strides = [1, 1]} : vector<2x128xf32> to vector<2x32xf32>
    %278 = vector.extract_strided_slice %273 {offsets = [0, 96], sizes = [2, 32], strides = [1, 1]} : vector<2x128xf32> to vector<2x32xf32>
    %279 = arith.mulf %276, %245 : vector<2x32xf32>
    %280 = arith.mulf %275, %277 : vector<2x32xf32>
    %281 = arith.addf %279, %280 : vector<2x32xf32>
    %282 = math.tanh %281 : vector<2x32xf32>
    %283 = arith.mulf %278, %282 : vector<2x32xf32>
    %284 = tpu.concatenate %283, %265 in 1 : vector<2x32xf32>, vector<2x32xf32> -> vector<2x64xf32>
    %cst_46 = arith.constant dense<0.000000e+00> : vector<2x128xf32>
    %285 = tpu.matmul %284, %2, %cst_46 {dimension_numbers = #tpu.dot_dimension_numbers<[1], [0], [0], [1], [0, 0, 1, 1], [], []>} : vector<2x64xf32>, vector<64x128xf32>, vector<2x128xf32> -> vector<2x128xf32>
    %286 = arith.addf %285, %6 : vector<2x128xf32>
    %287 = arith.negf %286 : vector<2x128xf32>
    %288 = math.exp %287 : vector<2x128xf32>
    %cst_47 = arith.constant 1.000000e+00 : f32
    %289 = vector.broadcast %cst_47 : f32 to vector<2x128xf32>
    %290 = arith.addf %289, %288 : vector<2x128xf32>
    %291 = arith.divf %289, %290 : vector<2x128xf32>
    %292 = math.tanh %286 : vector<2x128xf32>
    %293 = vector.extract_strided_slice %291 {offsets = [0, 0], sizes = [2, 32], strides = [1, 1]} : vector<2x128xf32> to vector<2x32xf32>
    %294 = vector.extract_strided_slice %291 {offsets = [0, 32], sizes = [2, 32], strides = [1, 1]} : vector<2x128xf32> to vector<2x32xf32>
    %295 = vector.extract_strided_slice %292 {offsets = [0, 64], sizes = [2, 32], strides = [1, 1]} : vector<2x128xf32> to vector<2x32xf32>
    %296 = vector.extract_strided_slice %291 {offsets = [0, 96], sizes = [2, 32], strides = [1, 1]} : vector<2x128xf32> to vector<2x32xf32>
    %297 = arith.mulf %294, %263 : vector<2x32xf32>
    %298 = arith.mulf %293, %295 : vector<2x32xf32>
    %299 = arith.addf %297, %298 : vector<2x32xf32>
    %300 = math.tanh %299 : vector<2x32xf32>
    %301 = arith.mulf %296, %300 : vector<2x32xf32>
    %cst_48 = arith.constant dense<0.000000e+00> : vector<2x128xf32>
    %302 = tpu.matmul %301, %3, %cst_48 {dimension_numbers = #tpu.dot_dimension_numbers<[1], [0], [0], [1], [0, 0, 1, 1], [], []>} : vector<2x32xf32>, vector<32x128xf32>, vector<2x128xf32> -> vector<2x128xf32>
    %303 = vector.broadcast %7 : vector<1x128xf32> to vector<2x128xf32>
    %304 = arith.addf %302, %303 : vector<2x128xf32>
    %c0_49 = arith.constant 0 : index
    %c0_50 = arith.constant 0 : index
    %305 = vector.load %arg8[%c0_49, %c0_50] : memref<2x128xf32, #tpu.memory_space<vmem>>, vector<2x128xf32>
    tpu.vector_store %arg8[%c0_49, %c0_50], %304 {strides = array<i32>} : memref<2x128xf32, #tpu.memory_space<vmem>>, vector<2x128xf32>,
    return
  }
}

</mosaic_0001>

<llo_original>
// kernel: tpu_custom_call.1
$region0: #{tpu_custom_call.1}
  #allocation0 [shape = 'u32[]', space=smem, size = 0x4, offset = 0x4, fixed_abs, tag = 'smem constant byte address 0x4 - core index']
  #allocation1 [shape = 'u32[144,128]{1,0:T(1,128)}', space=vmem, size = 0x12000, scoped, tag = 'internal scratch']
  %s0 = inlined_call_operand.vmem [shape: f32[16,4], index: 0, kind: input, shape index: {}]
  %s1 = inlined_call_operand.vmem [shape: f32[4,128], index: 1, kind: input, shape index: {}]
  %s2 = inlined_call_operand.hbm [shape: f32[32,128], index: 2, kind: input, shape index: {}]
  %s3 = inlined_call_operand.vmem [shape: f32[1,128], index: 3, kind: input, shape index: {}]
  %s4 = inlined_call_operand.hbm [shape: f32[64,128], index: 4, kind: input, shape index: {}]
  %s5 = inlined_call_operand.vmem [shape: f32[1,128], index: 5, kind: input, shape index: {}]
  %s6 = inlined_call_operand.vmem [shape: f32[32,128], index: 6, kind: input, shape index: {}]
  %s7 = inlined_call_operand.vmem [shape: f32[1,128], index: 7, kind: input, shape index: {}]
  %s8 = inlined_call_operand.hbm [shape: f32[2,128], index: 8, kind: output, shape index: {}]
  %s9 = sld [smem:[#allocation0]]
  $region50: #{tpu_custom_call.1} parent=0
    _
  %s11 = ssub.s32 1, %s9
  %s12 = scalar_select 0, %s11, %s9
  $region1: #{tpu_custom_call.1} parent=0
    #allocation2 [shape = 'u8[16384]{0}', space=vmem, size = 0x4000, scoped, tag = 'input window, operand 2, single buffered']
    #allocation3 [shape = 's32[1]{0}', space=sflag, size = 0x4, scoped, tag = 'scoped memory for tpu_custom_call.1']
    #allocation4 [shape = 's32[1]{0}', space=sflag, size = 0x4, scoped, tag = 'scoped memory for tpu_custom_call.1']
    #allocation5 [shape = 'u8[32768]{0}', space=vmem, size = 0x8000, scoped, tag = 'input window, operand 4, single buffered']
    #allocation6 [shape = 's32[1]{0}', space=sflag, size = 0x4, scoped, tag = 'scoped memory for tpu_custom_call.1']
    #allocation7 [shape = 'u8[1024]{0}', space=vmem, size = 0x400, scoped, tag = 'output window, operand 0, single buffered']
    %13 = vsyncpa [#allocation3], 0
    %14 = vsyncpa [#allocation6], 0
    %15 = vsyncpa [#allocation4], 0
    // Predicated region
    $region2: #{tpu_custom_call.1} parent=1 // pred_check
      _
    $region3: #{tpu_custom_call.1} parent=1 // pred_check_branch
      %17 = sbr.rel (0) target = $region5
    $region4: #{tpu_custom_call.1} parent=1 // pred_region
      _
    $region5: #{tpu_custom_call.1} parent=1 // pred_fallthru
      _
    // Predicated region
    $region6: #{tpu_custom_call.1} parent=1 // pred_check
      _
    $region7: #{tpu_custom_call.1} parent=1 // pred_check_branch
      %19 = sbr.rel (0) target = $region9
    $region8: #{tpu_custom_call.1} parent=1 // pred_region
      _
    $region9: #{tpu_custom_call.1} parent=1 // pred_fallthru
      _
    // Predicated region
    $region10: #{tpu_custom_call.1} parent=1 // pred_check
      _
    $region11: #{tpu_custom_call.1} parent=1 // pred_check_branch
      %21 = sbr.rel (0) target = $region13
    $region12: #{tpu_custom_call.1} parent=1 // pred_region
      %s23 = ssub.s32 512, 512
      %24 = vsyncadd [#allocation3], %s23
      %s25 = sshll.u32 [#allocation2], 4
      %s26 = int_to_ptr.vmem [resolvable:$true] %s25
      %31 = dma.hbm_to_vmem [thread:$0]  %s2, 512, %s26, [#allocation3], 128, 128, 8
    $region13: #{tpu_custom_call.1} parent=1 // pred_fallthru
      _
    // Predicated region
    $region14: #{tpu_custom_call.1} parent=1 // pred_check
      _
    $region15: #{tpu_custom_call.1} parent=1 // pred_check_branch
      %33 = sbr.rel (0) target = $region17
    $region16: #{tpu_custom_call.1} parent=1 // pred_region
      _
    $region17: #{tpu_custom_call.1} parent=1 // pred_fallthru
      _
    // Predicated region
    $region18: #{tpu_custom_call.1} parent=1 // pred_check
      _
    $region19: #{tpu_custom_call.1} parent=1 // pred_check_branch
      %35 = sbr.rel (0) target = $region21
    $region20: #{tpu_custom_call.1} parent=1 // pred_region
      %s37 = ssub.s32 1024, 1024
      %38 = vsyncadd [#allocation6], %s37
      %s39 = sshll.u32 [#allocation5], 4
      %s40 = int_to_ptr.vmem [resolvable:$true] %s39
      %45 = dma.hbm_to_vmem [thread:$0]  %s4, 1024, %s40, [#allocation6], 128, 128, 8
    $region21: #{tpu_custom_call.1} parent=1 // pred_fallthru
      _
    // Predicated region
    $region22: #{tpu_custom_call.1} parent=1 // pred_check
      _
    $region23: #{tpu_custom_call.1} parent=1 // pred_check_branch
      %47 = sbr.rel (0) target = $region25
    $region24: #{tpu_custom_call.1} parent=1 // pred_region
      _
    $region25: #{tpu_custom_call.1} parent=1 // pred_fallthru
      _
    // Predicated region
    $region26: #{tpu_custom_call.1} parent=1 // pred_check
      _
    $region27: #{tpu_custom_call.1} parent=1 // pred_check_branch
      %49 = sbr.rel (0) target = $region29
    $region28: #{tpu_custom_call.1} parent=1 // pred_region
      _
    $region29: #{tpu_custom_call.1} parent=1 // pred_fallthru
      _
    // Predicated region
    $region30: #{tpu_custom_call.1} parent=1 // pred_check
      _
    $region31: #{tpu_custom_call.1} parent=1 // pred_check_branch
      %51 = sbr.rel (0) target = $region33
    $region32: #{tpu_custom_call.1} parent=1 // pred_region
      _
    $region33: #{tpu_custom_call.1} parent=1 // pred_fallthru
      _
    // Predicated region
    $region34: #{tpu_custom_call.1} parent=1 // pred_check
      _
    $region35: #{tpu_custom_call.1} parent=1 // pred_check_branch
      %53 = sbr.rel (0) target = $region37
    $region36: #{tpu_custom_call.1} parent=1 // pred_region
      %54 = dma.done [#allocation3], 512
    $region37: #{tpu_custom_call.1} parent=1 // pred_fallthru
      _
    // Predicated region
    $region38: #{tpu_custom_call.1} parent=1 // pred_check
      _
    $region39: #{tpu_custom_call.1} parent=1 // pred_check_branch
      %56 = sbr.rel (0) target = $region41
    $region40: #{tpu_custom_call.1} parent=1 // pred_region
      %57 = dma.done [#allocation6], 1024
    $region41: #{tpu_custom_call.1} parent=1 // pred_fallthru
      _
    %v58 = vld [vmem:[%s1] sm:$0xf]
    %v59 = vld [vmem:[#allocation2] sm:$0xff]
    %v60 = vld [vmem:[#allocation2 + $0x8] sm:$0xff]
    %v61 = vld [vmem:[#allocation2 + $0x10] sm:$0xff]
    %v62 = vld [vmem:[#allocation2 + $0x18] sm:$0xff]
    %v63 = vld [vmem:[#allocation5] sm:$0xff]
    %v64 = vld [vmem:[#allocation5 + $0x8] sm:$0xff]
    %v65 = vld [vmem:[#allocation5 + $0x10] sm:$0xff]
    %v66 = vld [vmem:[#allocation5 + $0x18] sm:$0xff]
    %v67 = vld [vmem:[#allocation5 + $0x20] sm:$0xff]
    %v68 = vld [vmem:[#allocation5 + $0x28] sm:$0xff]
    %v69 = vld [vmem:[#allocation5 + $0x30] sm:$0xff]
    %v70 = vld [vmem:[#allocation5 + $0x38] sm:$0xff]
    %v71 = vld [vmem:[%s6] sm:$0xff]
    %v72 = vld [vmem:[%s6 + $0x8] sm:$0xff]
    %v73 = vld [vmem:[%s6 + $0x10] sm:$0xff]
    %v74 = vld [vmem:[%s6 + $0x18] sm:$0xff]
    %v75 = vld [vmem:[%s5] sm:$0x1]
    %v77 = vlaneseq
    %v78 = vshrl.u32 %v77, 7
    %v79 = vsub.s32 0, %v78
    %v80 = vrot.slane %v75, %v79
    %v82 = vld [vmem:[%s7] sm:$0x1]
    %v83 = vld [vmem:[%s0] sm:$0xff]
    %v84 = vld [vmem:[%s0 + $0x8] sm:$0xff]
    %v85 = vld [vmem:[%s3] sm:$0x1]
    %v87 = vlaneseq
    %v88 = vshrl.u32 %v87, 7
    %v89 = vsub.s32 0, %v88
    %v90 = vrot.slane %v85, %v89
    %vm92 = vcmask 31744
    %v94 = vsel %vm92, %v83, 0
    %v97 = vsel %vm92, %v84, 0
    %vm99 = vcmask 1043456
    %v101 = vsel %vm99, %v58, 0
    %103 = vmatprep.subr.mxu0 0.0
    %104 = vmatpush1.msra.mxu0 %v101
    %105 = vmatprep.subr.mxu0 0.0
    %106 = vmatpush1.msra.mxu0 0.0
    %107 = vmatprep.subr.mxu0 0.0
    %108 = vmatpush1.msra.mxu0 0.0
    %109 = vmatprep.subr.mxu0 0.0
    %110 = vmatpush1.msra.mxu0 0.0
    %111 = vmatprep.subr.mxu0 0.0
    %112 = vmatpush1.msra.mxu0 0.0
    %113 = vmatprep.subr.mxu0 0.0
    %114 = vmatpush1.msra.mxu0 0.0
    %115 = vmatprep.subr.mxu0 0.0
    %116 = vmatpush1.msra.mxu0 0.0
    %117 = vmatprep.subr.mxu0 0.0
    %118 = vmatpush1.msra.mxu0 0.0
    %119 = vmatprep.subr.mxu0 0.0
    %120 = vmatpush1.msra.mxu0 0.0
    %121 = vmatprep.subr.mxu0 0.0
    %122 = vmatpush1.msra.mxu0 0.0
    %123 = vmatprep.subr.mxu0 0.0
    %124 = vmatpush1.msra.mxu0 0.0
    %125 = vmatprep.subr.mxu0 0.0
    %126 = vmatpush1.msra.mxu0 0.0
    %127 = vmatprep.subr.mxu0 0.0
    %128 = vmatpush1.msra.mxu0 0.0
    %129 = vmatprep.subr.mxu0 0.0
    %130 = vmatpush1.msra.mxu0 0.0
    %131 = vmatprep.subr.mxu0 0.0
    %132 = vmatpush1.msra.mxu0 0.0
    %133 = vmatprep.subr.mxu0 0.0
    %134 = vmatpush1.msra.mxu0 0.0
    %135 = vmatprep.subr.mxu0 0.0
    %136 = vmatpush1.msra.mxu0 0.0
    %137 = vmatprep.subr.mxu0 0.0
    %138 = vmatpush1.msra.mxu0 0.0
    %139 = vmatprep.subr.mxu0 0.0
    %140 = vmatpush1.msra.mxu0 0.0
    %141 = vmatprep.subr.mxu0 0.0
    %142 = vmatpush1.msra.mxu0 0.0
    %143 = vmatprep.subr.mxu0 0.0
    %144 = vmatpush1.msra.mxu0 0.0
    %145 = vmatprep.subr.mxu0 0.0
    %146 = vmatpush1.msra.mxu0 0.0
    %147 = vmatprep.subr.mxu0 0.0
    %148 = vmatpush1.msra.mxu0 0.0
    %149 = vmatprep.subr.mxu0 0.0
    %150 = vmatpush1.msra.mxu0 0.0
    %151 = vmatprep.subr.mxu0 0.0
    %152 = vmatpush1.msra.mxu0 0.0
    %153 = vmatprep.subr.mxu0 0.0
    %154 = vmatpush1.msra.mxu0 0.0
    %155 = vmatprep.subr.mxu0 0.0
    %156 = vmatpush1.msra.mxu0 0.0
    %157 = vmatprep.subr.mxu0 0.0
    %158 = vmatpush1.msra.mxu0 0.0
    %159 = vmatprep.subr.mxu0 0.0
    %160 = vmatpush1.msra.mxu0 0.0
    %161 = vmatprep.subr.mxu0 0.0
    %162 = vmatpush1.msra.mxu0 0.0
    %163 = vmatprep.subr.mxu0 0.0
    %164 = vmatpush1.msra.mxu0 0.0
    %165 = vmatprep.subr.mxu0 0.0
    %166 = vmatpush1.msra.mxu0 0.0
    %167 = vmatprep.mubr.f32.mxu0 0.0
    %168 = vmatmul.mubr.f32.gmra.mrb[0].mxu0 %v94
    %v169 = vpop.f32.mrb[0].mxu0
    %v170 = vadd.f32 %v90, %v169
    %v171 = vpop.f32.mrb[0].mxu0
    %172 = vmatprep.mubr.f32.mxu0 0.0
    %173 = vmatmul.mubr.f32.gmra.mrb[0].mxu0 %v97
    %v174 = vpop.f32.mrb[0].mxu0
    %v175 = vadd.f32 %v90, %v174
    %v176 = vpop.f32.mrb[0].mxu0
    %177 = vdwg.mxu0
    %vm178 = vcmask 261120
    %v180 = vsel %vm178, 0.0, 0
    %182 = vmatprep.subr.mxu0 0.0
    %183 = vmatpush1.msra.mxu0 %v59
    %184 = vmatprep.subr.mxu0 0.0
    %185 = vmatpush1.msra.mxu0 %v60
    %186 = vmatprep.subr.mxu0 0.0
    %187 = vmatpush1.msra.mxu0 %v61
    %188 = vmatprep.subr.mxu0 0.0
    %189 = vmatpush1.msra.mxu0 %v62
    %190 = vmatprep.subr.mxu0 0.0
    %191 = vmatpush1.msra.mxu0 0.0
    %192 = vmatprep.subr.mxu0 0.0
    %193 = vmatpush1.msra.mxu0 0.0
    %194 = vmatprep.subr.mxu0 0.0
    %195 = vmatpush1.msra.mxu0 0.0
    %196 = vmatprep.subr.mxu0 0.0
    %197 = vmatpush1.msra.mxu0 0.0
    %198 = vmatprep.subr.mxu0 0.0
    %199 = vmatpush1.msra.mxu0 0.0
    %200 = vmatprep.subr.mxu0 0.0
    %201 = vmatpush1.msra.mxu0 0.0
    %202 = vmatprep.subr.mxu0 0.0
    %203 = vmatpush1.msra.mxu0 0.0
    %204 = vmatprep.subr.mxu0 0.0
    %205 = vmatpush1.msra.mxu0 0.0
    %206 = vmatprep.subr.mxu0 0.0
    %207 = vmatpush1.msra.mxu0 0.0
    %208 = vmatprep.subr.mxu0 0.0
    %209 = vmatpush1.msra.mxu0 0.0
    %210 = vmatprep.subr.mxu0 0.0
    %211 = vmatpush1.msra.mxu0 0.0
    %212 = vmatprep.subr.mxu0 0.0
    %213 = vmatpush1.msra.mxu0 0.0
    %214 = vmatprep.subr.mxu0 0.0
    %215 = vmatpush1.msra.mxu0 0.0
    %216 = vmatprep.subr.mxu0 0.0
    %217 = vmatpush1.msra.mxu0 0.0
    %218 = vmatprep.subr.mxu0 0.0
    %219 = vmatpush1.msra.mxu0 0.0
    %220 = vmatprep.subr.mxu0 0.0
    %221 = vmatpush1.msra.mxu0 0.0
    %222 = vmatprep.subr.mxu0 0.0
    %223 = vmatpush1.msra.mxu0 0.0
    %224 = vmatprep.subr.mxu0 0.0
    %225 = vmatpush1.msra.mxu0 0.0
    %226 = vmatprep.subr.mxu0 0.0
    %227 = vmatpush1.msra.mxu0 0.0
    %228 = vmatprep.subr.mxu0 0.0
    %229 = vmatpush1.msra.mxu0 0.0
    %230 = vmatprep.subr.mxu0 0.0
    %231 = vmatpush1.msra.mxu0 0.0
    %232 = vmatprep.subr.mxu0 0.0
    %233 = vmatpush1.msra.mxu0 0.0
    %234 = vmatprep.subr.mxu0 0.0
    %235 = vmatpush1.msra.mxu0 0.0
    %236 = vmatprep.subr.mxu0 0.0
    %237 = vmatpush1.msra.mxu0 0.0
    %238 = vmatprep.subr.mxu0 0.0
    %239 = vmatpush1.msra.mxu0 0.0
    %240 = vmatprep.subr.mxu0 0.0
    %241 = vmatpush1.msra.mxu0 0.0
    %242 = vmatprep.subr.mxu0 0.0
    %243 = vmatpush1.msra.mxu0 0.0
    %244 = vmatprep.subr.mxu0 0.0
    %245 = vmatpush1.msra.mxu0 0.0
    %246 = vmatprep.mubr.f32.mxu0 0.0
    %247 = vmatmul.mubr.f32.gmra.mrb[0].mxu0 %v180
    %v248 = vpop.f32.mrb[0].mxu0
    %v249 = vadd.f32 0.0, %v248
    %v250 = vpop.f32.mrb[0].mxu0
    %251 = vdwg.mxu0
    %v252 = vadd.f32 %v170, %v249
    %v253 = vxor.u32 %v252, 2147483648
    %v254 = vmul.f32 %v253, 1.442695
    %v255 = vpow.pop %v254
    %v256 = vadd.f32 %v255, 1.0
    %v257 = vrcp.pop %v256
    %v258 = vmul.f32 1.0, %v257
    %v259 = vtanh.pop %v252
    %v260 = vmul.f32 %v258, 0.0
    %262 = vrot.lane.b32.xlu0 %v259, 64
    %v263 = vpop.permute.xlu0 %262
    %v265 = vmul.f32 %v258, %v263
    %267 = vrot.lane.b32.xlu0 %v265, 32
    %v268 = vpop.permute.xlu0 %267
    %v270 = vadd.f32 %v260, %v268
    %v271 = vtanh.pop %v270
    %273 = vrot.lane.b32.xlu0 %v271, 64
    %v274 = vpop.permute.xlu0 %273
    %v276 = vmul.f32 %v258, %v274
    %278 = vrot.lane.b32.xlu0 %v276, 32
    %v279 = vpop.permute.xlu0 %278
    %v281 = vsel %vm178, %v279, 0.0
    %vm282 = vcmask 523264
    %v284 = vsel %vm282, %v281, 0
    %286 = vmatprep.subr.mxu0 0.0
    %287 = vmatpush1.msra.mxu0 %v63
    %288 = vmatprep.subr.mxu0 0.0
    %289 = vmatpush1.msra.mxu0 %v64
    %290 = vmatprep.subr.mxu0 0.0
    %291 = vmatpush1.msra.mxu0 %v65
    %292 = vmatprep.subr.mxu0 0.0
    %293 = vmatpush1.msra.mxu0 %v66
    %294 = vmatprep.subr.mxu0 0.0
    %295 = vmatpush1.msra.mxu0 %v67
    %296 = vmatprep.subr.mxu0 0.0
    %297 = vmatpush1.msra.mxu0 %v68
    %298 = vmatprep.subr.mxu0 0.0
    %299 = vmatpush1.msra.mxu0 %v69
    %300 = vmatprep.subr.mxu0 0.0
    %301 = vmatpush1.msra.mxu0 %v70
    %302 = vmatprep.subr.mxu0 0.0
    %303 = vmatpush1.msra.mxu0 0.0
    %304 = vmatprep.subr.mxu0 0.0
    %305 = vmatpush1.msra.mxu0 0.0
    %306 = vmatprep.subr.mxu0 0.0
    %307 = vmatpush1.msra.mxu0 0.0
    %308 = vmatprep.subr.mxu0 0.0
    %309 = vmatpush1.msra.mxu0 0.0
    %310 = vmatprep.subr.mxu0 0.0
    %311 = vmatpush1.msra.mxu0 0.0
    %312 = vmatprep.subr.mxu0 0.0
    %313 = vmatpush1.msra.mxu0 0.0
    %314 = vmatprep.subr.mxu0 0.0
    %315 = vmatpush1.msra.mxu0 0.0
    %316 = vmatprep.subr.mxu0 0.0
    %317 = vmatpush1.msra.mxu0 0.0
    %318 = vmatprep.subr.mxu0 0.0
    %319 = vmatpush1.msra.mxu0 0.0
    %320 = vmatprep.subr.mxu0 0.0
    %321 = vmatpush1.msra.mxu0 0.0
    %322 = vmatprep.subr.mxu0 0.0
    %323 = vmatpush1.msra.mxu0 0.0
    %324 = vmatprep.subr.mxu0 0.0
    %325 = vmatpush1.msra.mxu0 0.0
    %326 = vmatprep.subr.mxu0 0.0
    %327 = vmatpush1.msra.mxu0 0.0
    %328 = vmatprep.subr.mxu0 0.0
    %329 = vmatpush1.msra.mxu0 0.0
    %330 = vmatprep.subr.mxu0 0.0
    %331 = vmatpush1.msra.mxu0 0.0
    %332 = vmatprep.subr.mxu0 0.0
    %333 = vmatpush1.msra.mxu0 0.0
    %334 = vmatprep.subr.mxu0 0.0
    %335 = vmatpush1.msra.mxu0 0.0
    %336 = vmatprep.subr.mxu0 0.0
    %337 = vmatpush1.msra.mxu0 0.0
    %338 = vmatprep.subr.mxu0 0.0
    %339 = vmatpush1.msra.mxu0 0.0
    %340 = vmatprep.subr.mxu0 0.0
    %341 = vmatpush1.msra.mxu0 0.0
    %342 = vmatprep.subr.mxu0 0.0
    %343 = vmatpush1.msra.mxu0 0.0
    %344 = vmatprep.subr.mxu0 0.0
    %345 = vmatpush1.msra.mxu0 0.0
    %346 = vmatprep.subr.mxu0 0.0
    %347 = vmatpush1.msra.mxu0 0.0
    %348 = vmatprep.subr.mxu0 0.0
    %349 = vmatpush1.msra.mxu0 0.0
    %350 = vmatprep.mubr.f32.mxu0 0.0
    %351 = vmatmul.mubr.f32.gmra.mrb[0].mxu0 %v284
    %v352 = vpop.f32.mrb[0].mxu0
    %v353 = vadd.f32 %v80, %v352
    %v354 = vpop.f32.mrb[0].mxu0
    %355 = vdwg.mxu0
    %v356 = vxor.u32 %v353, 2147483648
    %v357 = vmul.f32 %v356, 1.442695
    %v358 = vpow.pop %v357
    %v359 = vadd.f32 %v358, 1.0
    %v360 = vrcp.pop %v359
    %v361 = vmul.f32 1.0, %v360
    %v362 = vtanh.pop %v353
    %v363 = vmul.f32 %v361, 0.0
    %365 = vrot.lane.b32.xlu0 %v362, 64
    %v366 = vpop.permute.xlu0 %365
    %v368 = vmul.f32 %v361, %v366
    %370 = vrot.lane.b32.xlu0 %v368, 32
    %v371 = vpop.permute.xlu0 %370
    %v373 = vadd.f32 %v363, %v371
    %v374 = vtanh.pop %v373
    %376 = vrot.lane.b32.xlu0 %v374, 64
    %v377 = vpop.permute.xlu0 %376
    %v379 = vmul.f32 %v361, %v377
    %v380 = vsel %vm178, %v279, 0
    %382 = vmatprep.subr.mxu0 0.0
    %383 = vmatpush1.msra.mxu0 %v59
    %384 = vmatprep.subr.mxu0 0.0
    %385 = vmatpush1.msra.mxu0 %v60
    %386 = vmatprep.subr.mxu0 0.0
    %387 = vmatpush1.msra.mxu0 %v61
    %388 = vmatprep.subr.mxu0 0.0
    %389 = vmatpush1.msra.mxu0 %v62
    %390 = vmatprep.subr.mxu0 0.0
    %391 = vmatpush1.msra.mxu0 0.0
    %392 = vmatprep.subr.mxu0 0.0
    %393 = vmatpush1.msra.mxu0 0.0
    %394 = vmatprep.subr.mxu0 0.0
    %395 = vmatpush1.msra.mxu0 0.0
    %396 = vmatprep.subr.mxu0 0.0
    %397 = vmatpush1.msra.mxu0 0.0
    %398 = vmatprep.subr.mxu0 0.0
    %399 = vmatpush1.msra.mxu0 0.0
    %400 = vmatprep.subr.mxu0 0.0
    %401 = vmatpush1.msra.mxu0 0.0
    %402 = vmatprep.subr.mxu0 0.0
    %403 = vmatpush1.msra.mxu0 0.0
    %404 = vmatprep.subr.mxu0 0.0
    %405 = vmatpush1.msra.mxu0 0.0
    %406 = vmatprep.subr.mxu0 0.0
    %407 = vmatpush1.msra.mxu0 0.0
    %408 = vmatprep.subr.mxu0 0.0
    %409 = vmatpush1.msra.mxu0 0.0
    %410 = vmatprep.subr.mxu0 0.0
    %411 = vmatpush1.msra.mxu0 0.0
    %412 = vmatprep.subr.mxu0 0.0
    %413 = vmatpush1.msra.mxu0 0.0
    %414 = vmatprep.subr.mxu0 0.0
    %415 = vmatpush1.msra.mxu0 0.0
    %416 = vmatprep.subr.mxu0 0.0
    %417 = vmatpush1.msra.mxu0 0.0
    %418 = vmatprep.subr.mxu0 0.0
    %419 = vmatpush1.msra.mxu0 0.0
    %420 = vmatprep.subr.mxu0 0.0
    %421 = vmatpush1.msra.mxu0 0.0
    %422 = vmatprep.subr.mxu0 0.0
    %423 = vmatpush1.msra.mxu0 0.0
    %424 = vmatprep.subr.mxu0 0.0
    %425 = vmatpush1.msra.mxu0 0.0
    %426 = vmatprep.subr.mxu0 0.0
    %427 = vmatpush1.msra.mxu0 0.0
    %428 = vmatprep.subr.mxu0 0.0
    %429 = vmatpush1.msra.mxu0 0.0
    %430 = vmatprep.subr.mxu0 0.0
    %431 = vmatpush1.msra.mxu0 0.0
    %432 = vmatprep.subr.mxu0 0.0
    %433 = vmatpush1.msra.mxu0 0.0
    %434 = vmatprep.subr.mxu0 0.0
    %435 = vmatpush1.msra.mxu0 0.0
    %436 = vmatprep.subr.mxu0 0.0
    %437 = vmatpush1.msra.mxu0 0.0
    %438 = vmatprep.subr.mxu0 0.0
    %439 = vmatpush1.msra.mxu0 0.0
    %440 = vmatprep.subr.mxu0 0.0
    %441 = vmatpush1.msra.mxu0 0.0
    %442 = vmatprep.subr.mxu0 0.0
    %443 = vmatpush1.msra.mxu0 0.0
    %444 = vmatprep.subr.mxu0 0.0
    %445 = vmatpush1.msra.mxu0 0.0
    %446 = vmatprep.mubr.f32.mxu0 0.0
    %447 = vmatmul.mubr.f32.gmra.mrb[0].mxu0 %v380
    %v448 = vpop.f32.mrb[0].mxu0
    %v449 = vadd.f32 0.0, %v448
    %v450 = vpop.f32.mrb[0].mxu0
    %451 = vdwg.mxu0
    %v453 = vrot.slane %v449, 6
    %v455 = vadd.f32 %v170, %v453
    %v456 = vxor.u32 %v455, 2147483648
    %v457 = vmul.f32 %v456, 1.442695
    %v458 = vpow.pop %v457
    %v459 = vadd.f32 %v458, 1.0
    %v460 = vrcp.pop %v459
    %v461 = vmul.f32 1.0, %v460
    %v462 = vtanh.pop %v455
    %v464 = vrot.slane %v270, 6
    %v466 = vmul.f32 %v461, %v464
    %468 = vrot.lane.b32.xlu0 %v462, 64
    %v469 = vpop.permute.xlu0 %468
    %v471 = vmul.f32 %v461, %v469
    %473 = vrot.lane.b32.xlu0 %v471, 32
    %v474 = vpop.permute.xlu0 %473
    %v476 = vadd.f32 %v466, %v474
    %v477 = vtanh.pop %v476
    %479 = vrot.lane.b32.xlu0 %v477, 64
    %v480 = vpop.permute.xlu0 %479
    %v482 = vmul.f32 %v461, %v480
    %484 = vrot.lane.b32.xlu0 %v482, 32
    %v485 = vpop.permute.xlu0 %484
    %v488 = vrot.slane %v379, 6
    %489 = vrot.lane.b32.xlu0 %v488, 64
    %v490 = vpop.permute.xlu0 %489
    %v492 = vsel %vm178, %v485, %v490
    %v494 = vrot.slane %v492, 2
    %v495 = vsel %vm282, %v494, 0
    %497 = vmatprep.subr.mxu0 0.0
    %498 = vmatpush1.msra.mxu0 %v63
    %499 = vmatprep.subr.mxu0 0.0
    %500 = vmatpush1.msra.mxu0 %v64
    %501 = vmatprep.subr.mxu0 0.0
    %502 = vmatpush1.msra.mxu0 %v65
    %503 = vmatprep.subr.mxu0 0.0
    %504 = vmatpush1.msra.mxu0 %v66
    %505 = vmatprep.subr.mxu0 0.0
    %506 = vmatpush1.msra.mxu0 %v67
    %507 = vmatprep.subr.mxu0 0.0
    %508 = vmatpush1.msra.mxu0 %v68
    %509 = vmatprep.subr.mxu0 0.0
    %510 = vmatpush1.msra.mxu0 %v69
    %511 = vmatprep.subr.mxu0 0.0
    %512 = vmatpush1.msra.mxu0 %v70
    %513 = vmatprep.subr.mxu0 0.0
    %514 = vmatpush1.msra.mxu0 0.0
    %515 = vmatprep.subr.mxu0 0.0
    %516 = vmatpush1.msra.mxu0 0.0
    %517 = vmatprep.subr.mxu0 0.0
    %518 = vmatpush1.msra.mxu0 0.0
    %519 = vmatprep.subr.mxu0 0.0
    %520 = vmatpush1.msra.mxu0 0.0
    %521 = vmatprep.subr.mxu0 0.0
    %522 = vmatpush1.msra.mxu0 0.0
    %523 = vmatprep.subr.mxu0 0.0
    %524 = vmatpush1.msra.mxu0 0.0
    %525 = vmatprep.subr.mxu0 0.0
    %526 = vmatpush1.msra.mxu0 0.0
    %527 = vmatprep.subr.mxu0 0.0
    %528 = vmatpush1.msra.mxu0 0.0
    %529 = vmatprep.subr.mxu0 0.0
    %530 = vmatpush1.msra.mxu0 0.0
    %531 = vmatprep.subr.mxu0 0.0
    %532 = vmatpush1.msra.mxu0 0.0
    %533 = vmatprep.subr.mxu0 0.0
    %534 = vmatpush1.msra.mxu0 0.0
    %535 = vmatprep.subr.mxu0 0.0
    %536 = vmatpush1.msra.mxu0 0.0
    %537 = vmatprep.subr.mxu0 0.0
    %538 = vmatpush1.msra.mxu0 0.0
    %539 = vmatprep.subr.mxu0 0.0
    %540 = vmatpush1.msra.mxu0 0.0
    %541 = vmatprep.subr.mxu0 0.0
    %542 = vmatpush1.msra.mxu0 0.0
    %543 = vmatprep.subr.mxu0 0.0
    %544 = vmatpush1.msra.mxu0 0.0
    %545 = vmatprep.subr.mxu0 0.0
    %546 = vmatpush1.msra.mxu0 0.0
    %547 = vmatprep.subr.mxu0 0.0
    %548 = vmatpush1.msra.mxu0 0.0
    %549 = vmatprep.subr.mxu0 0.0
    %550 = vmatpush1.msra.mxu0 0.0
    %551 = vmatprep.subr.mxu0 0.0
    %552 = vmatpush1.msra.mxu0 0.0
    %553 = vmatprep.subr.mxu0 0.0
    %554 = vmatpush1.msra.mxu0 0.0
    %555 = vmatprep.subr.mxu0 0.0
    %556 = vmatpush1.msra.mxu0 0.0
    %557 = vmatprep.subr.mxu0 0.0
    %558 = vmatpush1.msra.mxu0 0.0
    %559 = vmatprep.subr.mxu0 0.0
    %560 = vmatpush1.msra.mxu0 0.0
    %561 = vmatprep.mubr.f32.mxu0 0.0
    %562 = vmatmul.mubr.f32.gmra.mrb[0].mxu0 %v495
    %v563 = vpop.f32.mrb[0].mxu0
    %v564 = vadd.f32 %v80, %v563
    %v565 = vpop.f32.mrb[0].mxu0
    %566 = vdwg.mxu0
    %v567 = vxor.u32 %v564, 2147483648
    %v568 = vmul.f32 %v567, 1.442695
    %v569 = vpow.pop %v568
    %v570 = vadd.f32 %v569, 1.0
    %v571 = vrcp.pop %v570
    %v572 = vmul.f32 1.0, %v571
    %v573 = vtanh.pop %v564
    %v574 = vmul.f32 %v572, %v373
    %576 = vrot.lane.b32.xlu0 %v573, 64
    %v577 = vpop.permute.xlu0 %576
    %v579 = vmul.f32 %v572, %v577
    %581 = vrot.lane.b32.xlu0 %v579, 32
    %v582 = vpop.permute.xlu0 %581
    %v584 = vadd.f32 %v574, %v582
    %v585 = vtanh.pop %v584
    %587 = vrot.lane.b32.xlu0 %v585, 64
    %v588 = vpop.permute.xlu0 %587
    %v590 = vmul.f32 %v572, %v588
    %v591 = vrot.slane %v482, 2
    %592 = vrot.lane.b32.xlu0 %v591, 32
    %v593 = vpop.permute.xlu0 %592
    %v594 = vsel %vm178, %v593, 0
    %596 = vmatprep.subr.mxu0 0.0
    %597 = vmatpush1.msra.mxu0 %v59
    %598 = vmatprep.subr.mxu0 0.0
    %599 = vmatpush1.msra.mxu0 %v60
    %600 = vmatprep.subr.mxu0 0.0
    %601 = vmatpush1.msra.mxu0 %v61
    %602 = vmatprep.subr.mxu0 0.0
    %603 = vmatpush1.msra.mxu0 %v62
    %604 = vmatprep.subr.mxu0 0.0
    %605 = vmatpush1.msra.mxu0 0.0
    %606 = vmatprep.subr.mxu0 0.0
    %607 = vmatpush1.msra.mxu0 0.0
    %608 = vmatprep.subr.mxu0 0.0
    %609 = vmatpush1.msra.mxu0 0.0
    %610 = vmatprep.subr.mxu0 0.0
    %611 = vmatpush1.msra.mxu0 0.0
    %612 = vmatprep.subr.mxu0 0.0
    %613 = vmatpush1.msra.mxu0 0.0
    %614 = vmatprep.subr.mxu0 0.0
    %615 = vmatpush1.msra.mxu0 0.0
    %616 = vmatprep.subr.mxu0 0.0
    %617 = vmatpush1.msra.mxu0 0.0
    %618 = vmatprep.subr.mxu0 0.0
    %619 = vmatpush1.msra.mxu0 0.0
    %620 = vmatprep.subr.mxu0 0.0
    %621 = vmatpush1.msra.mxu0 0.0
    %622 = vmatprep.subr.mxu0 0.0
    %623 = vmatpush1.msra.mxu0 0.0
    %624 = vmatprep.subr.mxu0 0.0
    %625 = vmatpush1.msra.mxu0 0.0
    %626 = vmatprep.subr.mxu0 0.0
    %627 = vmatpush1.msra.mxu0 0.0
    %628 = vmatprep.subr.mxu0 0.0
    %629 = vmatpush1.msra.mxu0 0.0
    %630 = vmatprep.subr.mxu0 0.0
    %631 = vmatpush1.msra.mxu0 0.0
    %632 = vmatprep.subr.mxu0 0.0
    %633 = vmatpush1.msra.mxu0 0.0
    %634 = vmatprep.subr.mxu0 0.0
    %635 = vmatpush1.msra.mxu0 0.0
    %636 = vmatprep.subr.mxu0 0.0
    %637 = vmatpush1.msra.mxu0 0.0
    %638 = vmatprep.subr.mxu0 0.0
    %639 = vmatpush1.msra.mxu0 0.0
    %640 = vmatprep.subr.mxu0 0.0
    %641 = vmatpush1.msra.mxu0 0.0
    %642 = vmatprep.subr.mxu0 0.0
    %643 = vmatpush1.msra.mxu0 0.0
    %644 = vmatprep.subr.mxu0 0.0
    %645 = vmatpush1.msra.mxu0 0.0
    %646 = vmatprep.subr.mxu0 0.0
    %647 = vmatpush1.msra.mxu0 0.0
    %648 = vmatprep.subr.mxu0 0.0
    %649 = vmatpush1.msra.mxu0 0.0
    %650 = vmatprep.subr.mxu0 0.0
    %651 = vmatpush1.msra.mxu0 0.0
    %652 = vmatprep.subr.mxu0 0.0
    %653 = vmatpush1.msra.mxu0 0.0
    %654 = vmatprep.subr.mxu0 0.0
    %655 = vmatpush1.msra.mxu0 0.0
    %656 = vmatprep.subr.mxu0 0.0
    %657 = vmatpush1.msra.mxu0 0.0
    %658 = vmatprep.subr.mxu0 0.0
    %659 = vmatpush1.msra.mxu0 0.0
    %660 = vmatprep.mubr.f32.mxu0 0.0
    %661 = vmatmul.mubr.f32.gmra.mrb[0].mxu0 %v594
    %v662 = vpop.f32.mrb[0].mxu0
    %v663 = vadd.f32 0.0, %v662
    %v664 = vpop.f32.mrb[0].mxu0
    %665 = vdwg.mxu0
    %v667 = vrot.slane %v663, 4
    %v669 = vadd.f32 %v170, %v667
    %v670 = vxor.u32 %v669, 2147483648
    %v671 = vmul.f32 %v670, 1.442695
    %v672 = vpow.pop %v671
    %v673 = vadd.f32 %v672, 1.0
    %v674 = vrcp.pop %v673
    %v675 = vmul.f32 1.0, %v674
    %v676 = vtanh.pop %v669
    %v678 = vrot.slane %v476, 6
    %v680 = vmul.f32 %v675, %v678
    %682 = vrot.lane.b32.xlu0 %v676, 64
    %v683 = vpop.permute.xlu0 %682
    %v685 = vmul.f32 %v675, %v683
    %687 = vrot.lane.b32.xlu0 %v685, 32
    %v688 = vpop.permute.xlu0 %687
    %v690 = vadd.f32 %v680, %v688
    %v691 = vtanh.pop %v690
    %693 = vrot.lane.b32.xlu0 %v691, 64
    %v694 = vpop.permute.xlu0 %693
    %v696 = vmul.f32 %v675, %v694
    %698 = vrot.lane.b32.xlu0 %v696, 32
    %v699 = vpop.permute.xlu0 %698
    %v702 = vrot.slane %v590, 4
    %703 = vrot.lane.b32.xlu0 %v702, 64
    %v704 = vpop.permute.xlu0 %703
    %v706 = vsel %vm178, %v699, %v704
    %v708 = vrot.slane %v706, 4
    %v709 = vsel %vm282, %v708, 0
    %711 = vmatprep.subr.mxu0 0.0
    %712 = vmatpush1.msra.mxu0 %v63
    %713 = vmatprep.subr.mxu0 0.0
    %714 = vmatpush1.msra.mxu0 %v64
    %715 = vmatprep.subr.mxu0 0.0
    %716 = vmatpush1.msra.mxu0 %v65
    %717 = vmatprep.subr.mxu0 0.0
    %718 = vmatpush1.msra.mxu0 %v66
    %719 = vmatprep.subr.mxu0 0.0
    %720 = vmatpush1.msra.mxu0 %v67
    %721 = vmatprep.subr.mxu0 0.0
    %722 = vmatpush1.msra.mxu0 %v68
    %723 = vmatprep.subr.mxu0 0.0
    %724 = vmatpush1.msra.mxu0 %v69
    %725 = vmatprep.subr.mxu0 0.0
    %726 = vmatpush1.msra.mxu0 %v70
    %727 = vmatprep.subr.mxu0 0.0
    %728 = vmatpush1.msra.mxu0 0.0
    %729 = vmatprep.subr.mxu0 0.0
    %730 = vmatpush1.msra.mxu0 0.0
    %731 = vmatprep.subr.mxu0 0.0
    %732 = vmatpush1.msra.mxu0 0.0
    %733 = vmatprep.subr.mxu0 0.0
    %734 = vmatpush1.msra.mxu0 0.0
    %735 = vmatprep.subr.mxu0 0.0
    %736 = vmatpush1.msra.mxu0 0.0
    %737 = vmatprep.subr.mxu0 0.0
    %738 = vmatpush1.msra.mxu0 0.0
    %739 = vmatprep.subr.mxu0 0.0
    %740 = vmatpush1.msra.mxu0 0.0
    %741 = vmatprep.subr.mxu0 0.0
    %742 = vmatpush1.msra.mxu0 0.0
    %743 = vmatprep.subr.mxu0 0.0
    %744 = vmatpush1.msra.mxu0 0.0
    %745 = vmatprep.subr.mxu0 0.0
    %746 = vmatpush1.msra.mxu0 0.0
    %747 = vmatprep.subr.mxu0 0.0
    %748 = vmatpush1.msra.mxu0 0.0
    %749 = vmatprep.subr.mxu0 0.0
    %750 = vmatpush1.msra.mxu0 0.0
    %751 = vmatprep.subr.mxu0 0.0
    %752 = vmatpush1.msra.mxu0 0.0
    %753 = vmatprep.subr.mxu0 0.0
    %754 = vmatpush1.msra.mxu0 0.0
    %755 = vmatprep.subr.mxu0 0.0
    %756 = vmatpush1.msra.mxu0 0.0
    %757 = vmatprep.subr.mxu0 0.0
    %758 = vmatpush1.msra.mxu0 0.0
    %759 = vmatprep.subr.mxu0 0.0
    %760 = vmatpush1.msra.mxu0 0.0
    %761 = vmatprep.subr.mxu0 0.0
    %762 = vmatpush1.msra.mxu0 0.0
    %763 = vmatprep.subr.mxu0 0.0
    %764 = vmatpush1.msra.mxu0 0.0
    %765 = vmatprep.subr.mxu0 0.0
    %766 = vmatpush1.msra.mxu0 0.0
    %767 = vmatprep.subr.mxu0 0.0
    %768 = vmatpush1.msra.mxu0 0.0
    %769 = vmatprep.subr.mxu0 0.0
    %770 = vmatpush1.msra.mxu0 0.0
    %771 = vmatprep.subr.mxu0 0.0
    %772 = vmatpush1.msra.mxu0 0.0
    %773 = vmatprep.subr.mxu0 0.0
    %774 = vmatpush1.msra.mxu0 0.0
    %775 = vmatprep.mubr.f32.mxu0 0.0
    %776 = vmatmul.mubr.f32.gmra.mrb[0].mxu0 %v709
    %v777 = vpop.f32.mrb[0].mxu0
    %v778 = vadd.f32 %v80, %v777
    %v779 = vpop.f32.mrb[0].mxu0
    %780 = vdwg.mxu0
    %v781 = vxor.u32 %v778, 2147483648
    %v782 = vmul.f32 %v781, 1.442695
    %v783 = vpow.pop %v782
    %v784 = vadd.f32 %v783, 1.0
    %v785 = vrcp.pop %v784
    %v786 = vmul.f32 1.0, %v785
    %v787 = vtanh.pop %v778
    %v788 = vmul.f32 %v786, %v584
    %790 = vrot.lane.b32.xlu0 %v787, 64
    %v791 = vpop.permute.xlu0 %790
    %v793 = vmul.f32 %v786, %v791
    %795 = vrot.lane.b32.xlu0 %v793, 32
    %v796 = vpop.permute.xlu0 %795
    %v798 = vadd.f32 %v788, %v796
    %v799 = vtanh.pop %v798
    %801 = vrot.lane.b32.xlu0 %v799, 64
    %v802 = vpop.permute.xlu0 %801
    %v804 = vmul.f32 %v786, %v802
    %v805 = vrot.slane %v696, 4
    %806 = vrot.lane.b32.xlu0 %v805, 32
    %v807 = vpop.permute.xlu0 %806
    %v808 = vsel %vm178, %v807, 0
    %810 = vmatprep.subr.mxu0 0.0
    %811 = vmatpush1.msra.mxu0 %v59
    %812 = vmatprep.subr.mxu0 0.0
    %813 = vmatpush1.msra.mxu0 %v60
    %814 = vmatprep.subr.mxu0 0.0
    %815 = vmatpush1.msra.mxu0 %v61
    %816 = vmatprep.subr.mxu0 0.0
    %817 = vmatpush1.msra.mxu0 %v62
    %818 = vmatprep.subr.mxu0 0.0
    %819 = vmatpush1.msra.mxu0 0.0
    %820 = vmatprep.subr.mxu0 0.0
    %821 = vmatpush1.msra.mxu0 0.0
    %822 = vmatprep.subr.mxu0 0.0
    %823 = vmatpush1.msra.mxu0 0.0
    %824 = vmatprep.subr.mxu0 0.0
    %825 = vmatpush1.msra.mxu0 0.0
    %826 = vmatprep.subr.mxu0 0.0
    %827 = vmatpush1.msra.mxu0 0.0
    %828 = vmatprep.subr.mxu0 0.0
    %829 = vmatpush1.msra.mxu0 0.0
    %830 = vmatprep.subr.mxu0 0.0
    %831 = vmatpush1.msra.mxu0 0.0
    %832 = vmatprep.subr.mxu0 0.0
    %833 = vmatpush1.msra.mxu0 0.0
    %834 = vmatprep.subr.mxu0 0.0
    %835 = vmatpush1.msra.mxu0 0.0
    %836 = vmatprep.subr.mxu0 0.0
    %837 = vmatpush1.msra.mxu0 0.0
    %838 = vmatprep.subr.mxu0 0.0
    %839 = vmatpush1.msra.mxu0 0.0
    %840 = vmatprep.subr.mxu0 0.0
    %841 = vmatpush1.msra.mxu0 0.0
    %842 = vmatprep.subr.mxu0 0.0
    %843 = vmatpush1.msra.mxu0 0.0
    %844 = vmatprep.subr.mxu0 0.0
    %845 = vmatpush1.msra.mxu0 0.0
    %846 = vmatprep.subr.mxu0 0.0
    %847 = vmatpush1.msra.mxu0 0.0
    %848 = vmatprep.subr.mxu0 0.0
    %849 = vmatpush1.msra.mxu0 0.0
    %850 = vmatprep.subr.mxu0 0.0
    %851 = vmatpush1.msra.mxu0 0.0
    %852 = vmatprep.subr.mxu0 0.0
    %853 = vmatpush1.msra.mxu0 0.0
    %854 = vmatprep.subr.mxu0 0.0
    %855 = vmatpush1.msra.mxu0 0.0
    %856 = vmatprep.subr.mxu0 0.0
    %857 = vmatpush1.msra.mxu0 0.0
    %858 = vmatprep.subr.mxu0 0.0
    %859 = vmatpush1.msra.mxu0 0.0
    %860 = vmatprep.subr.mxu0 0.0
    %861 = vmatpush1.msra.mxu0 0.0
    %862 = vmatprep.subr.mxu0 0.0
    %863 = vmatpush1.msra.mxu0 0.0
    %864 = vmatprep.subr.mxu0 0.0
    %865 = vmatpush1.msra.mxu0 0.0
    %866 = vmatprep.subr.mxu0 0.0
    %867 = vmatpush1.msra.mxu0 0.0
    %868 = vmatprep.subr.mxu0 0.0
    %869 = vmatpush1.msra.mxu0 0.0
    %870 = vmatprep.subr.mxu0 0.0
    %871 = vmatpush1.msra.mxu0 0.0
    %872 = vmatprep.subr.mxu0 0.0
    %873 = vmatpush1.msra.mxu0 0.0
    %874 = vmatprep.mubr.f32.mxu0 0.0
    %875 = vmatmul.mubr.f32.gmra.mrb[0].mxu0 %v808
    %v876 = vpop.f32.mrb[0].mxu0
    %v877 = vadd.f32 0.0, %v876
    %v878 = vpop.f32.mrb[0].mxu0
    %879 = vdwg.mxu0
    %v881 = vrot.slane %v877, 2
    %v883 = vadd.f32 %v170, %v881
    %v884 = vxor.u32 %v883, 2147483648
    %v885 = vmul.f32 %v884, 1.442695
    %v886 = vpow.pop %v885
    %v887 = vadd.f32 %v886, 1.0
    %v888 = vrcp.pop %v887
    %v889 = vmul.f32 1.0, %v888
    %v890 = vtanh.pop %v883
    %v892 = vrot.slane %v690, 6
    %v894 = vmul.f32 %v889, %v892
    %896 = vrot.lane.b32.xlu0 %v890, 64
    %v897 = vpop.permute.xlu0 %896
    %v899 = vmul.f32 %v889, %v897
    %901 = vrot.lane.b32.xlu0 %v899, 32
    %v902 = vpop.permute.xlu0 %901
    %v904 = vadd.f32 %v894, %v902
    %v905 = vtanh.pop %v904
    %907 = vrot.lane.b32.xlu0 %v905, 64
    %v908 = vpop.permute.xlu0 %907
    %v910 = vmul.f32 %v889, %v908
    %912 = vrot.lane.b32.xlu0 %v910, 32
    %v913 = vpop.permute.xlu0 %912
    %v916 = vrot.slane %v804, 2
    %917 = vrot.lane.b32.xlu0 %v916, 64
    %v918 = vpop.permute.xlu0 %917
    %v920 = vsel %vm178, %v913, %v918
    %v922 = vrot.slane %v920, 6
    %v923 = vsel %vm282, %v922, 0
    %925 = vmatprep.subr.mxu0 0.0
    %926 = vmatpush1.msra.mxu0 %v63
    %927 = vmatprep.subr.mxu0 0.0
    %928 = vmatpush1.msra.mxu0 %v64
    %929 = vmatprep.subr.mxu0 0.0
    %930 = vmatpush1.msra.mxu0 %v65
    %931 = vmatprep.subr.mxu0 0.0
    %932 = vmatpush1.msra.mxu0 %v66
    %933 = vmatprep.subr.mxu0 0.0
    %934 = vmatpush1.msra.mxu0 %v67
    %935 = vmatprep.subr.mxu0 0.0
    %936 = vmatpush1.msra.mxu0 %v68
    %937 = vmatprep.subr.mxu0 0.0
    %938 = vmatpush1.msra.mxu0 %v69
    %939 = vmatprep.subr.mxu0 0.0
    %940 = vmatpush1.msra.mxu0 %v70
    %941 = vmatprep.subr.mxu0 0.0
    %942 = vmatpush1.msra.mxu0 0.0
    %943 = vmatprep.subr.mxu0 0.0
    %944 = vmatpush1.msra.mxu0 0.0
    %945 = vmatprep.subr.mxu0 0.0
    %946 = vmatpush1.msra.mxu0 0.0
    %947 = vmatprep.subr.mxu0 0.0
    %948 = vmatpush1.msra.mxu0 0.0
    %949 = vmatprep.subr.mxu0 0.0
    %950 = vmatpush1.msra.mxu0 0.0
    %951 = vmatprep.subr.mxu0 0.0
    %952 = vmatpush1.msra.mxu0 0.0
    %953 = vmatprep.subr.mxu0 0.0
    %954 = vmatpush1.msra.mxu0 0.0
    %955 = vmatprep.subr.mxu0 0.0
    %956 = vmatpush1.msra.mxu0 0.0
    %957 = vmatprep.subr.mxu0 0.0
    %958 = vmatpush1.msra.mxu0 0.0
    %959 = vmatprep.subr.mxu0 0.0
    %960 = vmatpush1.msra.mxu0 0.0
    %961 = vmatprep.subr.mxu0 0.0
    %962 = vmatpush1.msra.mxu0 0.0
    %963 = vmatprep.subr.mxu0 0.0
    %964 = vmatpush1.msra.mxu0 0.0
    %965 = vmatprep.subr.mxu0 0.0
    %966 = vmatpush1.msra.mxu0 0.0
    %967 = vmatprep.subr.mxu0 0.0
    %968 = vmatpush1.msra.mxu0 0.0
    %969 = vmatprep.subr.mxu0 0.0
    %970 = vmatpush1.msra.mxu0 0.0
    %971 = vmatprep.subr.mxu0 0.0
    %972 = vmatpush1.msra.mxu0 0.0
    %973 = vmatprep.subr.mxu0 0.0
    %974 = vmatpush1.msra.mxu0 0.0
    %975 = vmatprep.subr.mxu0 0.0
    %976 = vmatpush1.msra.mxu0 0.0
    %977 = vmatprep.subr.mxu0 0.0
    %978 = vmatpush1.msra.mxu0 0.0
    %979 = vmatprep.subr.mxu0 0.0
    %980 = vmatpush1.msra.mxu0 0.0
    %981 = vmatprep.subr.mxu0 0.0
    %982 = vmatpush1.msra.mxu0 0.0
    %983 = vmatprep.subr.mxu0 0.0
    %984 = vmatpush1.msra.mxu0 0.0
    %985 = vmatprep.subr.mxu0 0.0
    %986 = vmatpush1.msra.mxu0 0.0
    %987 = vmatprep.subr.mxu0 0.0
    %988 = vmatpush1.msra.mxu0 0.0
    %989 = vmatprep.mubr.f32.mxu0 0.0
    %990 = vmatmul.mubr.f32.gmra.mrb[0].mxu0 %v923
    %v991 = vpop.f32.mrb[0].mxu0
    %v992 = vadd.f32 %v80, %v991
    %v993 = vpop.f32.mrb[0].mxu0
    %994 = vdwg.mxu0
    %v995 = vxor.u32 %v992, 2147483648
    %v996 = vmul.f32 %v995, 1.442695
    %v997 = vpow.pop %v996
    %v998 = vadd.f32 %v997, 1.0
    %v999 = vrcp.pop %v998
    %v1000 = vmul.f32 1.0, %v999
    %v1001 = vtanh.pop %v992
    %v1002 = vmul.f32 %v1000, %v798
    %1004 = vrot.lane.b32.xlu0 %v1001, 64
    %v1005 = vpop.permute.xlu0 %1004
    %v1007 = vmul.f32 %v1000, %v1005
    %1009 = vrot.lane.b32.xlu0 %v1007, 32
    %v1010 = vpop.permute.xlu0 %1009
    %v1012 = vadd.f32 %v1002, %v1010
    %v1013 = vtanh.pop %v1012
    %1015 = vrot.lane.b32.xlu0 %v1013, 64
    %v1016 = vpop.permute.xlu0 %1015
    %v1018 = vmul.f32 %v1000, %v1016
    %v1019 = vrot.slane %v910, 6
    %1020 = vrot.lane.b32.xlu0 %v1019, 32
    %v1021 = vpop.permute.xlu0 %1020
    %v1022 = vsel %vm178, %v1021, 0
    %1024 = vmatprep.subr.mxu0 0.0
    %1025 = vmatpush1.msra.mxu0 %v59
    %1026 = vmatprep.subr.mxu0 0.0
    %1027 = vmatpush1.msra.mxu0 %v60
    %1028 = vmatprep.subr.mxu0 0.0
    %1029 = vmatpush1.msra.mxu0 %v61
    %1030 = vmatprep.subr.mxu0 0.0
    %1031 = vmatpush1.msra.mxu0 %v62
    %1032 = vmatprep.subr.mxu0 0.0
    %1033 = vmatpush1.msra.mxu0 0.0
    %1034 = vmatprep.subr.mxu0 0.0
    %1035 = vmatpush1.msra.mxu0 0.0
    %1036 = vmatprep.subr.mxu0 0.0
    %1037 = vmatpush1.msra.mxu0 0.0
    %1038 = vmatprep.subr.mxu0 0.0
    %1039 = vmatpush1.msra.mxu0 0.0
    %1040 = vmatprep.subr.mxu0 0.0
    %1041 = vmatpush1.msra.mxu0 0.0
    %1042 = vmatprep.subr.mxu0 0.0
    %1043 = vmatpush1.msra.mxu0 0.0
    %1044 = vmatprep.subr.mxu0 0.0
    %1045 = vmatpush1.msra.mxu0 0.0
    %1046 = vmatprep.subr.mxu0 0.0
    %1047 = vmatpush1.msra.mxu0 0.0
    %1048 = vmatprep.subr.mxu0 0.0
    %1049 = vmatpush1.msra.mxu0 0.0
    %1050 = vmatprep.subr.mxu0 0.0
    %1051 = vmatpush1.msra.mxu0 0.0
    %1052 = vmatprep.subr.mxu0 0.0
    %1053 = vmatpush1.msra.mxu0 0.0
    %1054 = vmatprep.subr.mxu0 0.0
    %1055 = vmatpush1.msra.mxu0 0.0
    %1056 = vmatprep.subr.mxu0 0.0
    %1057 = vmatpush1.msra.mxu0 0.0
    %1058 = vmatprep.subr.mxu0 0.0
    %1059 = vmatpush1.msra.mxu0 0.0
    %1060 = vmatprep.subr.mxu0 0.0
    %1061 = vmatpush1.msra.mxu0 0.0
    %1062 = vmatprep.subr.mxu0 0.0
    %1063 = vmatpush1.msra.mxu0 0.0
    %1064 = vmatprep.subr.mxu0 0.0
    %1065 = vmatpush1.msra.mxu0 0.0
    %1066 = vmatprep.subr.mxu0 0.0
    %1067 = vmatpush1.msra.mxu0 0.0
    %1068 = vmatprep.subr.mxu0 0.0
    %1069 = vmatpush1.msra.mxu0 0.0
    %1070 = vmatprep.subr.mxu0 0.0
    %1071 = vmatpush1.msra.mxu0 0.0
    %1072 = vmatprep.subr.mxu0 0.0
    %1073 = vmatpush1.msra.mxu0 0.0
    %1074 = vmatprep.subr.mxu0 0.0
    %1075 = vmatpush1.msra.mxu0 0.0
    %1076 = vmatprep.subr.mxu0 0.0
    %1077 = vmatpush1.msra.mxu0 0.0
    %1078 = vmatprep.subr.mxu0 0.0
    %1079 = vmatpush1.msra.mxu0 0.0
    %1080 = vmatprep.subr.mxu0 0.0
    %1081 = vmatpush1.msra.mxu0 0.0
    %1082 = vmatprep.subr.mxu0 0.0
    %1083 = vmatpush1.msra.mxu0 0.0
    %1084 = vmatprep.subr.mxu0 0.0
    %1085 = vmatpush1.msra.mxu0 0.0
    %1086 = vmatprep.subr.mxu0 0.0
    %1087 = vmatpush1.msra.mxu0 0.0
    %1088 = vmatprep.mubr.f32.mxu0 0.0
    %1089 = vmatmul.mubr.f32.gmra.mrb[0].mxu0 %v1022
    %v1090 = vpop.f32.mrb[0].mxu0
    %v1091 = vadd.f32 0.0, %v1090
    %v1092 = vpop.f32.mrb[0].mxu0
    %1093 = vdwg.mxu0
    %v1094 = vadd.f32 %v175, %v1091
    %v1095 = vxor.u32 %v1094, 2147483648
    %v1096 = vmul.f32 %v1095, 1.442695
    %v1097 = vpow.pop %v1096
    %v1098 = vadd.f32 %v1097, 1.0
    %v1099 = vrcp.pop %v1098
    %v1100 = vmul.f32 1.0, %v1099
    %v1101 = vtanh.pop %v1094
    %v1103 = vrot.slane %v904, 6
    %v1105 = vmul.f32 %v1100, %v1103
    %1107 = vrot.lane.b32.xlu0 %v1101, 64
    %v1108 = vpop.permute.xlu0 %1107
    %v1110 = vmul.f32 %v1100, %v1108
    %1112 = vrot.lane.b32.xlu0 %v1110, 32
    %v1113 = vpop.permute.xlu0 %1112
    %v1115 = vadd.f32 %v1105, %v1113
    %v1116 = vtanh.pop %v1115
    %1118 = vrot.lane.b32.xlu0 %v1116, 64
    %v1119 = vpop.permute.xlu0 %1118
    %v1121 = vmul.f32 %v1100, %v1119
    %1123 = vrot.lane.b32.xlu0 %v1121, 32
    %v1124 = vpop.permute.xlu0 %1123
    %1127 = vrot.lane.b32.xlu0 %v1018, 64
    %v1128 = vpop.permute.xlu0 %1127
    %v1130 = vsel %vm178, %v1124, %v1128
    %v1132 = vsel %vm282, %v1130, 0
    %1134 = vmatprep.subr.mxu0 0.0
    %1135 = vmatpush1.msra.mxu0 %v63
    %1136 = vmatprep.subr.mxu0 0.0
    %1137 = vmatpush1.msra.mxu0 %v64
    %1138 = vmatprep.subr.mxu0 0.0
    %1139 = vmatpush1.msra.mxu0 %v65
    %1140 = vmatprep.subr.mxu0 0.0
    %1141 = vmatpush1.msra.mxu0 %v66
    %1142 = vmatprep.subr.mxu0 0.0
    %1143 = vmatpush1.msra.mxu0 %v67
    %1144 = vmatprep.subr.mxu0 0.0
    %1145 = vmatpush1.msra.mxu0 %v68
    %1146 = vmatprep.subr.mxu0 0.0
    %1147 = vmatpush1.msra.mxu0 %v69
    %1148 = vmatprep.subr.mxu0 0.0
    %1149 = vmatpush1.msra.mxu0 %v70
    %1150 = vmatprep.subr.mxu0 0.0
    %1151 = vmatpush1.msra.mxu0 0.0
    %1152 = vmatprep.subr.mxu0 0.0
    %1153 = vmatpush1.msra.mxu0 0.0
    %1154 = vmatprep.subr.mxu0 0.0
    %1155 = vmatpush1.msra.mxu0 0.0
    %1156 = vmatprep.subr.mxu0 0.0
    %1157 = vmatpush1.msra.mxu0 0.0
    %1158 = vmatprep.subr.mxu0 0.0
    %1159 = vmatpush1.msra.mxu0 0.0
    %1160 = vmatprep.subr.mxu0 0.0
    %1161 = vmatpush1.msra.mxu0 0.0
    %1162 = vmatprep.subr.mxu0 0.0
    %1163 = vmatpush1.msra.mxu0 0.0
    %1164 = vmatprep.subr.mxu0 0.0
    %1165 = vmatpush1.msra.mxu0 0.0
    %1166 = vmatprep.subr.mxu0 0.0
    %1167 = vmatpush1.msra.mxu0 0.0
    %1168 = vmatprep.subr.mxu0 0.0
    %1169 = vmatpush1.msra.mxu0 0.0
    %1170 = vmatprep.subr.mxu0 0.0
    %1171 = vmatpush1.msra.mxu0 0.0
    %1172 = vmatprep.subr.mxu0 0.0
    %1173 = vmatpush1.msra.mxu0 0.0
    %1174 = vmatprep.subr.mxu0 0.0
    %1175 = vmatpush1.msra.mxu0 0.0
    %1176 = vmatprep.subr.mxu0 0.0
    %1177 = vmatpush1.msra.mxu0 0.0
    %1178 = vmatprep.subr.mxu0 0.0
    %1179 = vmatpush1.msra.mxu0 0.0
    %1180 = vmatprep.subr.mxu0 0.0
    %1181 = vmatpush1.msra.mxu0 0.0
    %1182 = vmatprep.subr.mxu0 0.0
    %1183 = vmatpush1.msra.mxu0 0.0
    %1184 = vmatprep.subr.mxu0 0.0
    %1185 = vmatpush1.msra.mxu0 0.0
    %1186 = vmatprep.subr.mxu0 0.0
    %1187 = vmatpush1.msra.mxu0 0.0
    %1188 = vmatprep.subr.mxu0 0.0
    %1189 = vmatpush1.msra.mxu0 0.0
    %1190 = vmatprep.subr.mxu0 0.0
    %1191 = vmatpush1.msra.mxu0 0.0
    %1192 = vmatprep.subr.mxu0 0.0
    %1193 = vmatpush1.msra.mxu0 0.0
    %1194 = vmatprep.subr.mxu0 0.0
    %1195 = vmatpush1.msra.mxu0 0.0
    %1196 = vmatprep.subr.mxu0 0.0
    %1197 = vmatpush1.msra.mxu0 0.0
    %1198 = vmatprep.mubr.f32.mxu0 0.0
    %1199 = vmatmul.mubr.f32.gmra.mrb[0].mxu0 %v1132
    %v1200 = vpop.f32.mrb[0].mxu0
    %v1201 = vadd.f32 %v80, %v1200
    %v1202 = vpop.f32.mrb[0].mxu0
    %1203 = vdwg.mxu0
    %v1204 = vxor.u32 %v1201, 2147483648
    %v1205 = vmul.f32 %v1204, 1.442695
    %v1206 = vpow.pop %v1205
    %v1207 = vadd.f32 %v1206, 1.0
    %v1208 = vrcp.pop %v1207
    %v1209 = vmul.f32 1.0, %v1208
    %v1210 = vtanh.pop %v1201
    %v1211 = vmul.f32 %v1209, %v1012
    %1213 = vrot.lane.b32.xlu0 %v1210, 64
    %v1214 = vpop.permute.xlu0 %1213
    %v1216 = vmul.f32 %v1209, %v1214
    %1218 = vrot.lane.b32.xlu0 %v1216, 32
    %v1219 = vpop.permute.xlu0 %1218
    %v1221 = vadd.f32 %v1211, %v1219
    %v1222 = vtanh.pop %v1221
    %1224 = vrot.lane.b32.xlu0 %v1222, 64
    %v1225 = vpop.permute.xlu0 %1224
    %v1227 = vmul.f32 %v1209, %v1225
    %v1228 = vsel %vm178, %v1124, 0
    %1230 = vmatprep.subr.mxu0 0.0
    %1231 = vmatpush1.msra.mxu0 %v59
    %1232 = vmatprep.subr.mxu0 0.0
    %1233 = vmatpush1.msra.mxu0 %v60
    %1234 = vmatprep.subr.mxu0 0.0
    %1235 = vmatpush1.msra.mxu0 %v61
    %1236 = vmatprep.subr.mxu0 0.0
    %1237 = vmatpush1.msra.mxu0 %v62
    %1238 = vmatprep.subr.mxu0 0.0
    %1239 = vmatpush1.msra.mxu0 0.0
    %1240 = vmatprep.subr.mxu0 0.0
    %1241 = vmatpush1.msra.mxu0 0.0
    %1242 = vmatprep.subr.mxu0 0.0
    %1243 = vmatpush1.msra.mxu0 0.0
    %1244 = vmatprep.subr.mxu0 0.0
    %1245 = vmatpush1.msra.mxu0 0.0
    %1246 = vmatprep.subr.mxu0 0.0
    %1247 = vmatpush1.msra.mxu0 0.0
    %1248 = vmatprep.subr.mxu0 0.0
    %1249 = vmatpush1.msra.mxu0 0.0
    %1250 = vmatprep.subr.mxu0 0.0
    %1251 = vmatpush1.msra.mxu0 0.0
    %1252 = vmatprep.subr.mxu0 0.0
    %1253 = vmatpush1.msra.mxu0 0.0
    %1254 = vmatprep.subr.mxu0 0.0
    %1255 = vmatpush1.msra.mxu0 0.0
    %1256 = vmatprep.subr.mxu0 0.0
    %1257 = vmatpush1.msra.mxu0 0.0
    %1258 = vmatprep.subr.mxu0 0.0
    %1259 = vmatpush1.msra.mxu0 0.0
    %1260 = vmatprep.subr.mxu0 0.0
    %1261 = vmatpush1.msra.mxu0 0.0
    %1262 = vmatprep.subr.mxu0 0.0
    %1263 = vmatpush1.msra.mxu0 0.0
    %1264 = vmatprep.subr.mxu0 0.0
    %1265 = vmatpush1.msra.mxu0 0.0
    %1266 = vmatprep.subr.mxu0 0.0
    %1267 = vmatpush1.msra.mxu0 0.0
    %1268 = vmatprep.subr.mxu0 0.0
    %1269 = vmatpush1.msra.mxu0 0.0
    %1270 = vmatprep.subr.mxu0 0.0
    %1271 = vmatpush1.msra.mxu0 0.0
    %1272 = vmatprep.subr.mxu0 0.0
    %1273 = vmatpush1.msra.mxu0 0.0
    %1274 = vmatprep.subr.mxu0 0.0
    %1275 = vmatpush1.msra.mxu0 0.0
    %1276 = vmatprep.subr.mxu0 0.0
    %1277 = vmatpush1.msra.mxu0 0.0
    %1278 = vmatprep.subr.mxu0 0.0
    %1279 = vmatpush1.msra.mxu0 0.0
    %1280 = vmatprep.subr.mxu0 0.0
    %1281 = vmatpush1.msra.mxu0 0.0
    %1282 = vmatprep.subr.mxu0 0.0
    %1283 = vmatpush1.msra.mxu0 0.0
    %1284 = vmatprep.subr.mxu0 0.0
    %1285 = vmatpush1.msra.mxu0 0.0
    %1286 = vmatprep.subr.mxu0 0.0
    %1287 = vmatpush1.msra.mxu0 0.0
    %1288 = vmatprep.subr.mxu0 0.0
    %1289 = vmatpush1.msra.mxu0 0.0
    %1290 = vmatprep.subr.mxu0 0.0
    %1291 = vmatpush1.msra.mxu0 0.0
    %1292 = vmatprep.subr.mxu0 0.0
    %1293 = vmatpush1.msra.mxu0 0.0
    %1294 = vmatprep.mubr.f32.mxu0 0.0
    %1295 = vmatmul.mubr.f32.gmra.mrb[0].mxu0 %v1228
    %v1296 = vpop.f32.mrb[0].mxu0
    %v1297 = vadd.f32 0.0, %v1296
    %v1298 = vpop.f32.mrb[0].mxu0
    %1299 = vdwg.mxu0
    %v1301 = vrot.slane %v1297, 6
    %v1303 = vadd.f32 %v175, %v1301
    %v1304 = vxor.u32 %v1303, 2147483648
    %v1305 = vmul.f32 %v1304, 1.442695
    %v1306 = vpow.pop %v1305
    %v1307 = vadd.f32 %v1306, 1.0
    %v1308 = vrcp.pop %v1307
    %v1309 = vmul.f32 1.0, %v1308
    %v1310 = vtanh.pop %v1303
    %v1312 = vrot.slane %v1115, 6
    %v1314 = vmul.f32 %v1309, %v1312
    %1316 = vrot.lane.b32.xlu0 %v1310, 64
    %v1317 = vpop.permute.xlu0 %1316
    %v1319 = vmul.f32 %v1309, %v1317
    %1321 = vrot.lane.b32.xlu0 %v1319, 32
    %v1322 = vpop.permute.xlu0 %1321
    %v1324 = vadd.f32 %v1314, %v1322
    %v1325 = vtanh.pop %v1324
    %1327 = vrot.lane.b32.xlu0 %v1325, 64
    %v1328 = vpop.permute.xlu0 %1327
    %v1330 = vmul.f32 %v1309, %v1328
    %1332 = vrot.lane.b32.xlu0 %v1330, 32
    %v1333 = vpop.permute.xlu0 %1332
    %v1336 = vrot.slane %v1227, 6
    %1337 = vrot.lane.b32.xlu0 %v1336, 64
    %v1338 = vpop.permute.xlu0 %1337
    %v1340 = vsel %vm178, %v1333, %v1338
    %v1342 = vrot.slane %v1340, 2
    %v1343 = vsel %vm282, %v1342, 0
    %1345 = vmatprep.subr.mxu0 0.0
    %1346 = vmatpush1.msra.mxu0 %v63
    %1347 = vmatprep.subr.mxu0 0.0
    %1348 = vmatpush1.msra.mxu0 %v64
    %1349 = vmatprep.subr.mxu0 0.0
    %1350 = vmatpush1.msra.mxu0 %v65
    %1351 = vmatprep.subr.mxu0 0.0
    %1352 = vmatpush1.msra.mxu0 %v66
    %1353 = vmatprep.subr.mxu0 0.0
    %1354 = vmatpush1.msra.mxu0 %v67
    %1355 = vmatprep.subr.mxu0 0.0
    %1356 = vmatpush1.msra.mxu0 %v68
    %1357 = vmatprep.subr.mxu0 0.0
    %1358 = vmatpush1.msra.mxu0 %v69
    %1359 = vmatprep.subr.mxu0 0.0
    %1360 = vmatpush1.msra.mxu0 %v70
    %1361 = vmatprep.subr.mxu0 0.0
    %1362 = vmatpush1.msra.mxu0 0.0
    %1363 = vmatprep.subr.mxu0 0.0
    %1364 = vmatpush1.msra.mxu0 0.0
    %1365 = vmatprep.subr.mxu0 0.0
    %1366 = vmatpush1.msra.mxu0 0.0
    %1367 = vmatprep.subr.mxu0 0.0
    %1368 = vmatpush1.msra.mxu0 0.0
    %1369 = vmatprep.subr.mxu0 0.0
    %1370 = vmatpush1.msra.mxu0 0.0
    %1371 = vmatprep.subr.mxu0 0.0
    %1372 = vmatpush1.msra.mxu0 0.0
    %1373 = vmatprep.subr.mxu0 0.0
    %1374 = vmatpush1.msra.mxu0 0.0
    %1375 = vmatprep.subr.mxu0 0.0
    %1376 = vmatpush1.msra.mxu0 0.0
    %1377 = vmatprep.subr.mxu0 0.0
    %1378 = vmatpush1.msra.mxu0 0.0
    %1379 = vmatprep.subr.mxu0 0.0
    %1380 = vmatpush1.msra.mxu0 0.0
    %1381 = vmatprep.subr.mxu0 0.0
    %1382 = vmatpush1.msra.mxu0 0.0
    %1383 = vmatprep.subr.mxu0 0.0
    %1384 = vmatpush1.msra.mxu0 0.0
    %1385 = vmatprep.subr.mxu0 0.0
    %1386 = vmatpush1.msra.mxu0 0.0
    %1387 = vmatprep.subr.mxu0 0.0
    %1388 = vmatpush1.msra.mxu0 0.0
    %1389 = vmatprep.subr.mxu0 0.0
    %1390 = vmatpush1.msra.mxu0 0.0
    %1391 = vmatprep.subr.mxu0 0.0
    %1392 = vmatpush1.msra.mxu0 0.0
    %1393 = vmatprep.subr.mxu0 0.0
    %1394 = vmatpush1.msra.mxu0 0.0
    %1395 = vmatprep.subr.mxu0 0.0
    %1396 = vmatpush1.msra.mxu0 0.0
    %1397 = vmatprep.subr.mxu0 0.0
    %1398 = vmatpush1.msra.mxu0 0.0
    %1399 = vmatprep.subr.mxu0 0.0
    %1400 = vmatpush1.msra.mxu0 0.0
    %1401 = vmatprep.subr.mxu0 0.0
    %1402 = vmatpush1.msra.mxu0 0.0
    %1403 = vmatprep.subr.mxu0 0.0
    %1404 = vmatpush1.msra.mxu0 0.0
    %1405 = vmatprep.subr.mxu0 0.0
    %1406 = vmatpush1.msra.mxu0 0.0
    %1407 = vmatprep.subr.mxu0 0.0
    %1408 = vmatpush1.msra.mxu0 0.0
    %1409 = vmatprep.mubr.f32.mxu0 0.0
    %1410 = vmatmul.mubr.f32.gmra.mrb[0].mxu0 %v1343
    %v1411 = vpop.f32.mrb[0].mxu0
    %v1412 = vadd.f32 %v80, %v1411
    %v1413 = vpop.f32.mrb[0].mxu0
    %1414 = vdwg.mxu0
    %v1415 = vxor.u32 %v1412, 2147483648
    %v1416 = vmul.f32 %v1415, 1.442695
    %v1417 = vpow.pop %v1416
    %v1418 = vadd.f32 %v1417, 1.0
    %v1419 = vrcp.pop %v1418
    %v1420 = vmul.f32 1.0, %v1419
    %v1421 = vtanh.pop %v1412
    %v1422 = vmul.f32 %v1420, %v1221
    %1424 = vrot.lane.b32.xlu0 %v1421, 64
    %v1425 = vpop.permute.xlu0 %1424
    %v1427 = vmul.f32 %v1420, %v1425
    %1429 = vrot.lane.b32.xlu0 %v1427, 32
    %v1430 = vpop.permute.xlu0 %1429
    %v1432 = vadd.f32 %v1422, %v1430
    %v1433 = vtanh.pop %v1432
    %1435 = vrot.lane.b32.xlu0 %v1433, 64
    %v1436 = vpop.permute.xlu0 %1435
    %v1438 = vmul.f32 %v1420, %v1436
    %v1439 = vrot.slane %v1330, 2
    %1440 = vrot.lane.b32.xlu0 %v1439, 32
    %v1441 = vpop.permute.xlu0 %1440
    %v1442 = vsel %vm178, %v1441, 0
    %1444 = vmatprep.subr.mxu0 0.0
    %1445 = vmatpush1.msra.mxu0 %v59
    %1446 = vmatprep.subr.mxu0 0.0
    %1447 = vmatpush1.msra.mxu0 %v60
    %1448 = vmatprep.subr.mxu0 0.0
    %1449 = vmatpush1.msra.mxu0 %v61
    %1450 = vmatprep.subr.mxu0 0.0
    %1451 = vmatpush1.msra.mxu0 %v62
    %1452 = vmatprep.subr.mxu0 0.0
    %1453 = vmatpush1.msra.mxu0 0.0
    %1454 = vmatprep.subr.mxu0 0.0
    %1455 = vmatpush1.msra.mxu0 0.0
    %1456 = vmatprep.subr.mxu0 0.0
    %1457 = vmatpush1.msra.mxu0 0.0
    %1458 = vmatprep.subr.mxu0 0.0
    %1459 = vmatpush1.msra.mxu0 0.0
    %1460 = vmatprep.subr.mxu0 0.0
    %1461 = vmatpush1.msra.mxu0 0.0
    %1462 = vmatprep.subr.mxu0 0.0
    %1463 = vmatpush1.msra.mxu0 0.0
    %1464 = vmatprep.subr.mxu0 0.0
    %1465 = vmatpush1.msra.mxu0 0.0
    %1466 = vmatprep.subr.mxu0 0.0
    %1467 = vmatpush1.msra.mxu0 0.0
    %1468 = vmatprep.subr.mxu0 0.0
    %1469 = vmatpush1.msra.mxu0 0.0
    %1470 = vmatprep.subr.mxu0 0.0
    %1471 = vmatpush1.msra.mxu0 0.0
    %1472 = vmatprep.subr.mxu0 0.0
    %1473 = vmatpush1.msra.mxu0 0.0
    %1474 = vmatprep.subr.mxu0 0.0
    %1475 = vmatpush1.msra.mxu0 0.0
    %1476 = vmatprep.subr.mxu0 0.0
    %1477 = vmatpush1.msra.mxu0 0.0
    %1478 = vmatprep.subr.mxu0 0.0
    %1479 = vmatpush1.msra.mxu0 0.0
    %1480 = vmatprep.subr.mxu0 0.0
    %1481 = vmatpush1.msra.mxu0 0.0
    %1482 = vmatprep.subr.mxu0 0.0
    %1483 = vmatpush1.msra.mxu0 0.0
    %1484 = vmatprep.subr.mxu0 0.0
    %1485 = vmatpush1.msra.mxu0 0.0
    %1486 = vmatprep.subr.mxu0 0.0
    %1487 = vmatpush1.msra.mxu0 0.0
    %1488 = vmatprep.subr.mxu0 0.0
    %1489 = vmatpush1.msra.mxu0 0.0
    %1490 = vmatprep.subr.mxu0 0.0
    %1491 = vmatpush1.msra.mxu0 0.0
    %1492 = vmatprep.subr.mxu0 0.0
    %1493 = vmatpush1.msra.mxu0 0.0
    %1494 = vmatprep.subr.mxu0 0.0
    %1495 = vmatpush1.msra.mxu0 0.0
    %1496 = vmatprep.subr.mxu0 0.0
    %1497 = vmatpush1.msra.mxu0 0.0
    %1498 = vmatprep.subr.mxu0 0.0
    %1499 = vmatpush1.msra.mxu0 0.0
    %1500 = vmatprep.subr.mxu0 0.0
    %1501 = vmatpush1.msra.mxu0 0.0
    %1502 = vmatprep.subr.mxu0 0.0
    %1503 = vmatpush1.msra.mxu0 0.0
    %1504 = vmatprep.subr.mxu0 0.0
    %1505 = vmatpush1.msra.mxu0 0.0
    %1506 = vmatprep.subr.mxu0 0.0
    %1507 = vmatpush1.msra.mxu0 0.0
    %1508 = vmatprep.mubr.f32.mxu0 0.0
    %1509 = vmatmul.mubr.f32.gmra.mrb[0].mxu0 %v1442
    %v1510 = vpop.f32.mrb[0].mxu0
    %v1511 = vadd.f32 0.0, %v1510
    %v1512 = vpop.f32.mrb[0].mxu0
    %1513 = vdwg.mxu0
    %v1515 = vrot.slane %v1511, 4
    %v1517 = vadd.f32 %v175, %v1515
    %v1518 = vxor.u32 %v1517, 2147483648
    %v1519 = vmul.f32 %v1518, 1.442695
    %v1520 = vpow.pop %v1519
    %v1521 = vadd.f32 %v1520, 1.0
    %v1522 = vrcp.pop %v1521
    %v1523 = vmul.f32 1.0, %v1522
    %v1524 = vtanh.pop %v1517
    %v1526 = vrot.slane %v1324, 6
    %v1528 = vmul.f32 %v1523, %v1526
    %1530 = vrot.lane.b32.xlu0 %v1524, 64
    %v1531 = vpop.permute.xlu0 %1530
    %v1533 = vmul.f32 %v1523, %v1531
    %1535 = vrot.lane.b32.xlu0 %v1533, 32
    %v1536 = vpop.permute.xlu0 %1535
    %v1538 = vadd.f32 %v1528, %v1536
    %v1539 = vtanh.pop %v1538
    %1541 = vrot.lane.b32.xlu0 %v1539, 64
    %v1542 = vpop.permute.xlu0 %1541
    %v1544 = vmul.f32 %v1523, %v1542
    %1546 = vrot.lane.b32.xlu0 %v1544, 32
    %v1547 = vpop.permute.xlu0 %1546
    %v1550 = vrot.slane %v1438, 4
    %1551 = vrot.lane.b32.xlu0 %v1550, 64
    %v1552 = vpop.permute.xlu0 %1551
    %v1554 = vsel %vm178, %v1547, %v1552
    %v1556 = vrot.slane %v1554, 4
    %v1557 = vsel %vm282, %v1556, 0
    %1559 = vmatprep.subr.mxu0 0.0
    %1560 = vmatpush1.msra.mxu0 %v63
    %1561 = vmatprep.subr.mxu0 0.0
    %1562 = vmatpush1.msra.mxu0 %v64
    %1563 = vmatprep.subr.mxu0 0.0
    %1564 = vmatpush1.msra.mxu0 %v65
    %1565 = vmatprep.subr.mxu0 0.0
    %1566 = vmatpush1.msra.mxu0 %v66
    %1567 = vmatprep.subr.mxu0 0.0
    %1568 = vmatpush1.msra.mxu0 %v67
    %1569 = vmatprep.subr.mxu0 0.0
    %1570 = vmatpush1.msra.mxu0 %v68
    %1571 = vmatprep.subr.mxu0 0.0
    %1572 = vmatpush1.msra.mxu0 %v69
    %1573 = vmatprep.subr.mxu0 0.0
    %1574 = vmatpush1.msra.mxu0 %v70
    %1575 = vmatprep.subr.mxu0 0.0
    %1576 = vmatpush1.msra.mxu0 0.0
    %1577 = vmatprep.subr.mxu0 0.0
    %1578 = vmatpush1.msra.mxu0 0.0
    %1579 = vmatprep.subr.mxu0 0.0
    %1580 = vmatpush1.msra.mxu0 0.0
    %1581 = vmatprep.subr.mxu0 0.0
    %1582 = vmatpush1.msra.mxu0 0.0
    %1583 = vmatprep.subr.mxu0 0.0
    %1584 = vmatpush1.msra.mxu0 0.0
    %1585 = vmatprep.subr.mxu0 0.0
    %1586 = vmatpush1.msra.mxu0 0.0
    %1587 = vmatprep.subr.mxu0 0.0
    %1588 = vmatpush1.msra.mxu0 0.0
    %1589 = vmatprep.subr.mxu0 0.0
    %1590 = vmatpush1.msra.mxu0 0.0
    %1591 = vmatprep.subr.mxu0 0.0
    %1592 = vmatpush1.msra.mxu0 0.0
    %1593 = vmatprep.subr.mxu0 0.0
    %1594 = vmatpush1.msra.mxu0 0.0
    %1595 = vmatprep.subr.mxu0 0.0
    %1596 = vmatpush1.msra.mxu0 0.0
    %1597 = vmatprep.subr.mxu0 0.0
    %1598 = vmatpush1.msra.mxu0 0.0
    %1599 = vmatprep.subr.mxu0 0.0
    %1600 = vmatpush1.msra.mxu0 0.0
    %1601 = vmatprep.subr.mxu0 0.0
    %1602 = vmatpush1.msra.mxu0 0.0
    %1603 = vmatprep.subr.mxu0 0.0
    %1604 = vmatpush1.msra.mxu0 0.0
    %1605 = vmatprep.subr.mxu0 0.0
    %1606 = vmatpush1.msra.mxu0 0.0
    %1607 = vmatprep.subr.mxu0 0.0
    %1608 = vmatpush1.msra.mxu0 0.0
    %1609 = vmatprep.subr.mxu0 0.0
    %1610 = vmatpush1.msra.mxu0 0.0
    %1611 = vmatprep.subr.mxu0 0.0
    %1612 = vmatpush1.msra.mxu0 0.0
    %1613 = vmatprep.subr.mxu0 0.0
    %1614 = vmatpush1.msra.mxu0 0.0
    %1615 = vmatprep.subr.mxu0 0.0
    %1616 = vmatpush1.msra.mxu0 0.0
    %1617 = vmatprep.subr.mxu0 0.0
    %1618 = vmatpush1.msra.mxu0 0.0
    %1619 = vmatprep.subr.mxu0 0.0
    %1620 = vmatpush1.msra.mxu0 0.0
    %1621 = vmatprep.subr.mxu0 0.0
    %1622 = vmatpush1.msra.mxu0 0.0
    %1623 = vmatprep.mubr.f32.mxu0 0.0
    %1624 = vmatmul.mubr.f32.gmra.mrb[0].mxu0 %v1557
    %v1625 = vpop.f32.mrb[0].mxu0
    %v1626 = vadd.f32 %v80, %v1625
    %v1627 = vpop.f32.mrb[0].mxu0
    %1628 = vdwg.mxu0
    %v1629 = vxor.u32 %v1626, 2147483648
    %v1630 = vmul.f32 %v1629, 1.442695
    %v1631 = vpow.pop %v1630
    %v1632 = vadd.f32 %v1631, 1.0
    %v1633 = vrcp.pop %v1632
    %v1634 = vmul.f32 1.0, %v1633
    %v1635 = vtanh.pop %v1626
    %v1636 = vmul.f32 %v1634, %v1432
    %1638 = vrot.lane.b32.xlu0 %v1635, 64
    %v1639 = vpop.permute.xlu0 %1638
    %v1641 = vmul.f32 %v1634, %v1639
    %1643 = vrot.lane.b32.xlu0 %v1641, 32
    %v1644 = vpop.permute.xlu0 %1643
    %v1646 = vadd.f32 %v1636, %v1644
    %v1647 = vtanh.pop %v1646
    %1649 = vrot.lane.b32.xlu0 %v1647, 64
    %v1650 = vpop.permute.xlu0 %1649
    %v1652 = vmul.f32 %v1634, %v1650
    %v1653 = vrot.slane %v1544, 4
    %1654 = vrot.lane.b32.xlu0 %v1653, 32
    %v1655 = vpop.permute.xlu0 %1654
    %v1656 = vsel %vm178, %v1655, 0
    %1658 = vmatprep.subr.mxu0 0.0
    %1659 = vmatpush1.msra.mxu0 %v59
    %1660 = vmatprep.subr.mxu0 0.0
    %1661 = vmatpush1.msra.mxu0 %v60
    %1662 = vmatprep.subr.mxu0 0.0
    %1663 = vmatpush1.msra.mxu0 %v61
    %1664 = vmatprep.subr.mxu0 0.0
    %1665 = vmatpush1.msra.mxu0 %v62
    %1666 = vmatprep.subr.mxu0 0.0
    %1667 = vmatpush1.msra.mxu0 0.0
    %1668 = vmatprep.subr.mxu0 0.0
    %1669 = vmatpush1.msra.mxu0 0.0
    %1670 = vmatprep.subr.mxu0 0.0
    %1671 = vmatpush1.msra.mxu0 0.0
    %1672 = vmatprep.subr.mxu0 0.0
    %1673 = vmatpush1.msra.mxu0 0.0
    %1674 = vmatprep.subr.mxu0 0.0
    %1675 = vmatpush1.msra.mxu0 0.0
    %1676 = vmatprep.subr.mxu0 0.0
    %1677 = vmatpush1.msra.mxu0 0.0
    %1678 = vmatprep.subr.mxu0 0.0
    %1679 = vmatpush1.msra.mxu0 0.0
    %1680 = vmatprep.subr.mxu0 0.0
    %1681 = vmatpush1.msra.mxu0 0.0
    %1682 = vmatprep.subr.mxu0 0.0
    %1683 = vmatpush1.msra.mxu0 0.0
    %1684 = vmatprep.subr.mxu0 0.0
    %1685 = vmatpush1.msra.mxu0 0.0
    %1686 = vmatprep.subr.mxu0 0.0
    %1687 = vmatpush1.msra.mxu0 0.0
    %1688 = vmatprep.subr.mxu0 0.0
    %1689 = vmatpush1.msra.mxu0 0.0
    %1690 = vmatprep.subr.mxu0 0.0
    %1691 = vmatpush1.msra.mxu0 0.0
    %1692 = vmatprep.subr.mxu0 0.0
    %1693 = vmatpush1.msra.mxu0 0.0
    %1694 = vmatprep.subr.mxu0 0.0
    %1695 = vmatpush1.msra.mxu0 0.0
    %1696 = vmatprep.subr.mxu0 0.0
    %1697 = vmatpush1.msra.mxu0 0.0
    %1698 = vmatprep.subr.mxu0 0.0
    %1699 = vmatpush1.msra.mxu0 0.0
    %1700 = vmatprep.subr.mxu0 0.0
    %1701 = vmatpush1.msra.mxu0 0.0
    %1702 = vmatprep.subr.mxu0 0.0
    %1703 = vmatpush1.msra.mxu0 0.0
    %1704 = vmatprep.subr.mxu0 0.0
    %1705 = vmatpush1.msra.mxu0 0.0
    %1706 = vmatprep.subr.mxu0 0.0
    %1707 = vmatpush1.msra.mxu0 0.0
    %1708 = vmatprep.subr.mxu0 0.0
    %1709 = vmatpush1.msra.mxu0 0.0
    %1710 = vmatprep.subr.mxu0 0.0
    %1711 = vmatpush1.msra.mxu0 0.0
    %1712 = vmatprep.subr.mxu0 0.0
    %1713 = vmatpush1.msra.mxu0 0.0
    %1714 = vmatprep.subr.mxu0 0.0
    %1715 = vmatpush1.msra.mxu0 0.0
    %1716 = vmatprep.subr.mxu0 0.0
    %1717 = vmatpush1.msra.mxu0 0.0
    %1718 = vmatprep.subr.mxu0 0.0
    %1719 = vmatpush1.msra.mxu0 0.0
    %1720 = vmatprep.subr.mxu0 0.0
    %1721 = vmatpush1.msra.mxu0 0.0
    %1722 = vmatprep.mubr.f32.mxu0 0.0
    %1723 = vmatmul.mubr.f32.gmra.mrb[0].mxu0 %v1656
    %v1724 = vpop.f32.mrb[0].mxu0
    %v1725 = vadd.f32 0.0, %v1724
    %v1726 = vpop.f32.mrb[0].mxu0
    %1727 = vdwg.mxu0
    %v1729 = vrot.slane %v1725, 2
    %v1731 = vadd.f32 %v175, %v1729
    %v1732 = vxor.u32 %v1731, 2147483648
    %v1733 = vmul.f32 %v1732, 1.442695
    %v1734 = vpow.pop %v1733
    %v1735 = vadd.f32 %v1734, 1.0
    %v1736 = vrcp.pop %v1735
    %v1737 = vmul.f32 1.0, %v1736
    %v1738 = vtanh.pop %v1731
    %v1740 = vrot.slane %v1538, 6
    %v1742 = vmul.f32 %v1737, %v1740
    %1744 = vrot.lane.b32.xlu0 %v1738, 64
    %v1745 = vpop.permute.xlu0 %1744
    %v1747 = vmul.f32 %v1737, %v1745
    %1749 = vrot.lane.b32.xlu0 %v1747, 32
    %v1750 = vpop.permute.xlu0 %1749
    %v1752 = vadd.f32 %v1742, %v1750
    %v1753 = vtanh.pop %v1752
    %1755 = vrot.lane.b32.xlu0 %v1753, 64
    %v1756 = vpop.permute.xlu0 %1755
    %v1758 = vmul.f32 %v1737, %v1756
    %1760 = vrot.lane.b32.xlu0 %v1758, 32
    %v1761 = vpop.permute.xlu0 %1760
    %v1764 = vrot.slane %v1652, 2
    %1765 = vrot.lane.b32.xlu0 %v1764, 64
    %v1766 = vpop.permute.xlu0 %1765
    %v1768 = vsel %vm178, %v1761, %v1766
    %v1770 = vrot.slane %v1768, 6
    %v1771 = vsel %vm282, %v1770, 0
    %1773 = vmatprep.subr.mxu0 0.0
    %1774 = vmatpush1.msra.mxu0 %v63
    %1775 = vmatprep.subr.mxu0 0.0
    %1776 = vmatpush1.msra.mxu0 %v64
    %1777 = vmatprep.subr.mxu0 0.0
    %1778 = vmatpush1.msra.mxu0 %v65
    %1779 = vmatprep.subr.mxu0 0.0
    %1780 = vmatpush1.msra.mxu0 %v66
    %1781 = vmatprep.subr.mxu0 0.0
    %1782 = vmatpush1.msra.mxu0 %v67
    %1783 = vmatprep.subr.mxu0 0.0
    %1784 = vmatpush1.msra.mxu0 %v68
    %1785 = vmatprep.subr.mxu0 0.0
    %1786 = vmatpush1.msra.mxu0 %v69
    %1787 = vmatprep.subr.mxu0 0.0
    %1788 = vmatpush1.msra.mxu0 %v70
    %1789 = vmatprep.subr.mxu0 0.0
    %1790 = vmatpush1.msra.mxu0 0.0
    %1791 = vmatprep.subr.mxu0 0.0
    %1792 = vmatpush1.msra.mxu0 0.0
    %1793 = vmatprep.subr.mxu0 0.0
    %1794 = vmatpush1.msra.mxu0 0.0
    %1795 = vmatprep.subr.mxu0 0.0
    %1796 = vmatpush1.msra.mxu0 0.0
    %1797 = vmatprep.subr.mxu0 0.0
    %1798 = vmatpush1.msra.mxu0 0.0
    %1799 = vmatprep.subr.mxu0 0.0
    %1800 = vmatpush1.msra.mxu0 0.0
    %1801 = vmatprep.subr.mxu0 0.0
    %1802 = vmatpush1.msra.mxu0 0.0
    %1803 = vmatprep.subr.mxu0 0.0
    %1804 = vmatpush1.msra.mxu0 0.0
    %1805 = vmatprep.subr.mxu0 0.0
    %1806 = vmatpush1.msra.mxu0 0.0
    %1807 = vmatprep.subr.mxu0 0.0
    %1808 = vmatpush1.msra.mxu0 0.0
    %1809 = vmatprep.subr.mxu0 0.0
    %1810 = vmatpush1.msra.mxu0 0.0
    %1811 = vmatprep.subr.mxu0 0.0
    %1812 = vmatpush1.msra.mxu0 0.0
    %1813 = vmatprep.subr.mxu0 0.0
    %1814 = vmatpush1.msra.mxu0 0.0
    %1815 = vmatprep.subr.mxu0 0.0
    %1816 = vmatpush1.msra.mxu0 0.0
    %1817 = vmatprep.subr.mxu0 0.0
    %1818 = vmatpush1.msra.mxu0 0.0
    %1819 = vmatprep.subr.mxu0 0.0
    %1820 = vmatpush1.msra.mxu0 0.0
    %1821 = vmatprep.subr.mxu0 0.0
    %1822 = vmatpush1.msra.mxu0 0.0
    %1823 = vmatprep.subr.mxu0 0.0
    %1824 = vmatpush1.msra.mxu0 0.0
    %1825 = vmatprep.subr.mxu0 0.0
    %1826 = vmatpush1.msra.mxu0 0.0
    %1827 = vmatprep.subr.mxu0 0.0
    %1828 = vmatpush1.msra.mxu0 0.0
    %1829 = vmatprep.subr.mxu0 0.0
    %1830 = vmatpush1.msra.mxu0 0.0
    %1831 = vmatprep.subr.mxu0 0.0
    %1832 = vmatpush1.msra.mxu0 0.0
    %1833 = vmatprep.subr.mxu0 0.0
    %1834 = vmatpush1.msra.mxu0 0.0
    %1835 = vmatprep.subr.mxu0 0.0
    %1836 = vmatpush1.msra.mxu0 0.0
    %1837 = vmatprep.mubr.f32.mxu0 0.0
    %1838 = vmatmul.mubr.f32.gmra.mrb[0].mxu0 %v1771
    %v1839 = vpop.f32.mrb[0].mxu0
    %v1840 = vadd.f32 %v80, %v1839
    %v1841 = vpop.f32.mrb[0].mxu0
    %1842 = vdwg.mxu0
    %v1843 = vxor.u32 %v1840, 2147483648
    %v1844 = vmul.f32 %v1843, 1.442695
    %v1845 = vpow.pop %v1844
    %v1846 = vadd.f32 %v1845, 1.0
    %v1847 = vrcp.pop %v1846
    %v1848 = vmul.f32 1.0, %v1847
    %v1849 = vtanh.pop %v1840
    %v1850 = vmul.f32 %v1848, %v1646
    %1852 = vrot.lane.b32.xlu0 %v1849, 64
    %v1853 = vpop.permute.xlu0 %1852
    %v1855 = vmul.f32 %v1848, %v1853
    %1857 = vrot.lane.b32.xlu0 %v1855, 32
    %v1858 = vpop.permute.xlu0 %1857
    %v1860 = vadd.f32 %v1850, %v1858
    %v1861 = vtanh.pop %v1860
    %1863 = vrot.lane.b32.xlu0 %v1861, 64
    %v1864 = vpop.permute.xlu0 %1863
    %v1866 = vmul.f32 %v1848, %v1864
    %v1868 = vlaneseq
    %v1869 = vshrl.u32 %v1868, 7
    %v1870 = vsub.s32 0, %v1869
    %v1871 = vrot.slane %v82, %v1870
    %1874 = vrot.lane.b32.xlu0 %v1866, 32
    %v1875 = vpop.permute.xlu0 %1874
    %v1876 = vsel %vm178, %v1875, 0
    %1878 = vmatprep.subr.mxu0 0.0
    %1879 = vmatpush1.msra.mxu0 %v71
    %1880 = vmatprep.subr.mxu0 0.0
    %1881 = vmatpush1.msra.mxu0 %v72
    %1882 = vmatprep.subr.mxu0 0.0
    %1883 = vmatpush1.msra.mxu0 %v73
    %1884 = vmatprep.subr.mxu0 0.0
    %1885 = vmatpush1.msra.mxu0 %v74
    %1886 = vmatprep.subr.mxu0 0.0
    %1887 = vmatpush1.msra.mxu0 0.0
    %1888 = vmatprep.subr.mxu0 0.0
    %1889 = vmatpush1.msra.mxu0 0.0
    %1890 = vmatprep.subr.mxu0 0.0
    %1891 = vmatpush1.msra.mxu0 0.0
    %1892 = vmatprep.subr.mxu0 0.0
    %1893 = vmatpush1.msra.mxu0 0.0
    %1894 = vmatprep.subr.mxu0 0.0
    %1895 = vmatpush1.msra.mxu0 0.0
    %1896 = vmatprep.subr.mxu0 0.0
    %1897 = vmatpush1.msra.mxu0 0.0
    %1898 = vmatprep.subr.mxu0 0.0
    %1899 = vmatpush1.msra.mxu0 0.0
    %1900 = vmatprep.subr.mxu0 0.0
    %1901 = vmatpush1.msra.mxu0 0.0
    %1902 = vmatprep.subr.mxu0 0.0
    %1903 = vmatpush1.msra.mxu0 0.0
    %1904 = vmatprep.subr.mxu0 0.0
    %1905 = vmatpush1.msra.mxu0 0.0
    %1906 = vmatprep.subr.mxu0 0.0
    %1907 = vmatpush1.msra.mxu0 0.0
    %1908 = vmatprep.subr.mxu0 0.0
    %1909 = vmatpush1.msra.mxu0 0.0
    %1910 = vmatprep.subr.mxu0 0.0
    %1911 = vmatpush1.msra.mxu0 0.0
    %1912 = vmatprep.subr.mxu0 0.0
    %1913 = vmatpush1.msra.mxu0 0.0
    %1914 = vmatprep.subr.mxu0 0.0
    %1915 = vmatpush1.msra.mxu0 0.0
    %1916 = vmatprep.subr.mxu0 0.0
    %1917 = vmatpush1.msra.mxu0 0.0
    %1918 = vmatprep.subr.mxu0 0.0
    %1919 = vmatpush1.msra.mxu0 0.0
    %1920 = vmatprep.subr.mxu0 0.0
    %1921 = vmatpush1.msra.mxu0 0.0
    %1922 = vmatprep.subr.mxu0 0.0
    %1923 = vmatpush1.msra.mxu0 0.0
    %1924 = vmatprep.subr.mxu0 0.0
    %1925 = vmatpush1.msra.mxu0 0.0
    %1926 = vmatprep.subr.mxu0 0.0
    %1927 = vmatpush1.msra.mxu0 0.0
    %1928 = vmatprep.subr.mxu0 0.0
    %1929 = vmatpush1.msra.mxu0 0.0
    %1930 = vmatprep.subr.mxu0 0.0
    %1931 = vmatpush1.msra.mxu0 0.0
    %1932 = vmatprep.subr.mxu0 0.0
    %1933 = vmatpush1.msra.mxu0 0.0
    %1934 = vmatprep.subr.mxu0 0.0
    %1935 = vmatpush1.msra.mxu0 0.0
    %1936 = vmatprep.subr.mxu0 0.0
    %1937 = vmatpush1.msra.mxu0 0.0
    %1938 = vmatprep.subr.mxu0 0.0
    %1939 = vmatpush1.msra.mxu0 0.0
    %1940 = vmatprep.subr.mxu0 0.0
    %1941 = vmatpush1.msra.mxu0 0.0
    %1942 = vmatprep.mubr.f32.mxu0 0.0
    %1943 = vmatmul.mubr.f32.gmra.mrb[0].mxu0 %v1876
    %v1944 = vpop.f32.mrb[0].mxu0
    %v1945 = vadd.f32 %v1871, %v1944
    %v1946 = vpop.f32.mrb[0].mxu0
    %1947 = vdwg.mxu0
    %1948 = vst [vmem:[#allocation7] sm:$0x3] %v1945
    // Predicated region
    $region42: #{tpu_custom_call.1} parent=1 // pred_check
      _
    $region43: #{tpu_custom_call.1} parent=1 // pred_check_branch
      %1950 = sbr.rel (0) target = $region45
    $region44: #{tpu_custom_call.1} parent=1 // pred_region
      %s1952 = ssub.s32 32, 32
      %1953 = vsyncadd [#allocation4], %s1952
      %s1955 = sshll.u32 [#allocation7], 4
      %s1956 = int_to_ptr.vmem [resolvable:$true] %s1955
      %1958 = dma.vmem_to_hbm [thread:$0]  %s1956, 32, %s8, [#allocation4]
    $region45: #{tpu_custom_call.1} parent=1 // pred_fallthru
      _
    // Predicated region
    $region46: #{tpu_custom_call.1} parent=1 // pred_check
      _
    $region47: #{tpu_custom_call.1} parent=1 // pred_check_branch
      %1960 = sbr.rel (0) target = $region49
    $region48: #{tpu_custom_call.1} parent=1 // pred_region
      %1961 = dma.done [#allocation4], 32
    $region49: #{tpu_custom_call.1} parent=1 // pred_fallthru
      _
    %1962 = vsyncpa [#allocation3], 1
    %1963 = vsyncpa [#allocation6], 1
    %1964 = vsyncpa [#allocation4], 1

</llo_original>
